<compile_context>
chip_gen: v7x
topology: tpu7x:2x2x1
jax: 0.10.0
libtpu: 0.0.40
codegen_flags: <defaults>
</compile_context>

<pallas_src>
import functools

import jax
import jax.numpy as jnp
from jax.experimental import pallas as pl
from jax.experimental.pallas import tpu as pltpu


# -----------------------------------------------------------------------------
# Fused kernel
# -----------------------------------------------------------------------------
def _local_net_kernel(idx_ref,            # SMEM (B, N) int32 flat kpt index (y*W + x)
                      p5_ref,             # (1, M_TILE, 25*Cin) bf16  5x5 im2col patches
                      mask_ref,           # (M_TILE, 9*Cmid)    bf16  conv2-tap validity
                      w1_ref, b1_ref,     # (25*Cin, 9*Cmid) bf16, (1, 9*Cmid) f32
                      w2_ref, b2_ref,     # (9*Cmid, Cfeat)  bf16, (1, Cfeat)  f32
                      wh_ref, bh_ref,     # (Cfeat, D)       bf16, (1, D)      f32
                      out_ref,            # (1, N, D) f32
                      g_acc,              # VMEM scratch (N, Cfeat) f32
                      *, HW, M_TILE, N):
    b = pl.program_id(0)
    t = pl.program_id(1)

    @pl.when(t == 0)
    def _():
        g_acc[...] = jnp.zeros_like(g_acc)

    # conv1 (3x3) + ReLU, emitted directly as the conv2 im2col patch rows:
    #   p2[p, (ly,lx,c)] = relu(conv1(img)[y+ly-1, x+lx-1, c])
    # masked to zero when the shifted pixel is outside the image (SAME padding).
    p2 = jnp.dot(p5_ref[0], w1_ref[...], preferred_element_type=jnp.float32)
    p2 = jnp.maximum(p2 + b1_ref[...], 0.0) * mask_ref[...].astype(jnp.float32)

    # conv2 (3x3) + ReLU as a single K = 9*Cmid matmul.
    h2 = jnp.dot(p2.astype(jnp.bfloat16), w2_ref[...],
                 preferred_element_type=jnp.float32)
    h2 = jnp.maximum(h2 + b2_ref[...], 0.0)                    # (M_TILE, Cfeat) f32

    # Vectorized keypoint gather: one-hot (N, M_TILE) @ h2 on the MXU,
    # accumulated across spatial tiles (each keypoint hits exactly one tile).
    row = jax.lax.broadcasted_iota(jnp.int32, (N, M_TILE), 0)
    col = jax.lax.broadcasted_iota(jnp.int32, (N, M_TILE), 1) + t * M_TILE
    oh = jnp.zeros((N, M_TILE), jnp.float32)
    for i in range(N):                                         # N is small & static
        fi = jnp.clip(idx_ref[b, i], 0, HW - 1)                # no OOB gathers
        oh = jnp.where((row == i) & (col == fi), 1.0, oh)
    g_acc[...] += jnp.dot(oh.astype(jnp.bfloat16), h2.astype(jnp.bfloat16),
                          preferred_element_type=jnp.float32)

    # 1x1 head + L2 normalization only on the N gathered rows.
    @pl.when(t == pl.num_programs(1) - 1)
    def _():
        g = g_acc[...]                                         # (N, Cfeat) f32
        d = jnp.dot(g.astype(jnp.bfloat16), wh_ref[...],
                    preferred_element_type=jnp.float32) + bh_ref[...]
        inv = jax.lax.rsqrt(jnp.sum(d * d, axis=-1, keepdims=True) + 1e-12)
        out_ref[0, :, :] = d * inv


# -----------------------------------------------------------------------------
# Parameter / input preparation (layout plumbing stays in JAX)
# -----------------------------------------------------------------------------
def _build_patch5(img):
    """NCHW image -> (B, H*W, 25*Cin) bf16 5x5 im2col patches (zero padded by 2)."""
    B, C, H, W = img.shape
    x = jnp.transpose(img, (0, 2, 3, 1))                       # NHWC
    xp = jnp.pad(x, ((0, 0), (2, 2), (2, 2), (0, 0)))
    taps = [xp[:, uy:uy + H, ux:ux + W, :]
            for uy in range(5) for ux in range(5)]
    p5 = jnp.concatenate(taps, axis=-1)                        # (B, H, W, 25*C)
    return p5.reshape(B, H * W, 25 * C).astype(jnp.bfloat16)


def _build_w1big(w1):
    """Fold 'conv1 evaluated at the 9 conv2 tap offsets' into one weight matrix.

    w1: (Cmid, Cin, 3, 3)  ->  (25*Cin, 9*Cmid) with
    W1big[(uy*5+ux)*Cin + ci, (ly*3+lx)*Cmid + c] = w1[c, ci, uy-ly, ux-lx].
    """
    c_mid, c_in = w1.shape[:2]
    w1big = jnp.zeros((25 * c_in, 9 * c_mid), jnp.float32)
    for ly in range(3):
        for lx in range(3):
            for ky in range(3):
                for kx in range(3):
                    uy, ux = ly + ky, lx + kx
                    r0 = (uy * 5 + ux) * c_in
                    c0 = (ly * 3 + lx) * c_mid
                    blk = w1[:, :, ky, kx].T                   # (Cin, Cmid)
                    w1big = w1big.at[r0:r0 + c_in, c0:c0 + c_mid].set(blk)
    return w1big.astype(jnp.bfloat16)


def _build_tap_mask(H, W, c_mid):
    """(H*W, 9*Cmid) bf16: 1 where conv2 tap (ly,lx) at pixel (y,x) is in-image."""
    yy = jnp.arange(H).reshape(H, 1, 1, 1)
    xx = jnp.arange(W).reshape(1, W, 1, 1)
    ly = jnp.arange(3).reshape(1, 1, 3, 1)
    lx = jnp.arange(3).reshape(1, 1, 1, 3)
    ok = ((yy + ly - 1 >= 0) & (yy + ly - 1 < H) &
          (xx + lx - 1 >= 0) & (xx + lx - 1 < W))              # (H, W, 3, 3)
    ok = ok.reshape(H * W, 9, 1)
    ok = jnp.broadcast_to(ok, (H * W, 9, c_mid)).reshape(H * W, 9 * c_mid)
    # TODO(synk): this mask is batch-invariant; it could be generated in-kernel
    # from iotas to save its (HW, 9*Cmid) HBM stream at very large H, W.
    return ok.astype(jnp.bfloat16)


def _fused_local_inference(params, img, kpts, *, m_tile=128):
    """img: [B, C, H, W] f32 NCHW, kpts: [B, N, 2] int32 (x, y) -> [B, N, D]."""
    B, C_in, H, W = img.shape
    N = kpts.shape[1]
    C_mid = params["body_w1"].shape[0]
    C_feat = params["body_w2"].shape[0]
    D = params["head_w"].shape[0]
    HW = H * W
    if HW % m_tile != 0:
        m_tile = HW                                            # single spatial tile
    T = HW // m_tile
    K1, K2 = 25 * C_in, 9 * C_mid

    p5 = _build_patch5(img)                                    # (B, HW, K1) bf16
    mask = _build_tap_mask(H, W, C_mid)                        # (HW, K2)    bf16
    w1b = _build_w1big(params["body_w1"])                      # (K1, K2)    bf16
    b1t = jnp.tile(params["body_b1"], 9).reshape(1, K2).astype(jnp.float32)
    w2p = jnp.transpose(params["body_w2"], (2, 3, 1, 0)).reshape(K2, C_feat)
    w2p = w2p.astype(jnp.bfloat16)
    b2r = params["body_b2"].reshape(1, C_feat).astype(jnp.float32)
    whp = params["head_w"].reshape(D, C_feat).T.astype(jnp.bfloat16)
    bhr = params["head_b"].reshape(1, D).astype(jnp.float32)

    # flat row index into the (HW, C) feature map: y * W + x
    flat_idx = (kpts[..., 1].astype(jnp.int32) * W
                + kpts[..., 0].astype(jnp.int32))              # (B, N) int32

    kernel = functools.partial(_local_net_kernel, HW=HW, M_TILE=m_tile, N=N)
    out = pl.pallas_call(
        kernel,
        out_shape=jax.ShapeDtypeStruct((B, N, D), jnp.float32),
        grid_spec=pltpu.PrefetchScalarGridSpec(
            num_scalar_prefetch=1,
            grid=(B, T),
            in_specs=[
                pl.BlockSpec((1, m_tile, K1), lambda b, t, idx: (b, t, 0)),
                pl.BlockSpec((m_tile, K2), lambda b, t, idx: (t, 0)),
                pl.BlockSpec((K1, K2), lambda b, t, idx: (0, 0)),
                pl.BlockSpec((1, K2), lambda b, t, idx: (0, 0)),
                pl.BlockSpec((K2, C_feat), lambda b, t, idx: (0, 0)),
                pl.BlockSpec((1, C_feat), lambda b, t, idx: (0, 0)),
                pl.BlockSpec((C_feat, D), lambda b, t, idx: (0, 0)),
                pl.BlockSpec((1, D), lambda b, t, idx: (0, 0)),
            ],
            out_specs=pl.BlockSpec((1, N, D), lambda b, t, idx: (b, 0, 0)),
            scratch_shapes=[pltpu.VMEM((N, C_feat), jnp.float32)],
        ),
        compiler_params=pltpu.CompilerParams(
            dimension_semantics=("parallel", "arbitrary"),
            vmem_limit_bytes=16 * 1024 * 1024),
    )(flat_idx, p5, mask, w1b, b1t, w2p, b2r, whp, bhr)
    return out


# -----------------------------------------------------------------------------
# Module-level glue (mirrors localNet.forward prediction branch)
# -----------------------------------------------------------------------------
def init_params(key, c_in=4, c_mid=16, c_feat=16, d_desc=32):
    ks = jax.random.split(key, 6)
    s1 = 1.0 / jnp.sqrt(c_in * 9)
    s2 = 1.0 / jnp.sqrt(c_mid * 9)
    s3 = 1.0 / jnp.sqrt(c_feat)
    return {
        "body_w1": jax.random.normal(ks[0], (c_mid, c_in, 3, 3), jnp.float32) * s1,
        "body_b1": jax.random.normal(ks[1], (c_mid,), jnp.float32) * 0.01,
        "body_w2": jax.random.normal(ks[2], (c_feat, c_mid, 3, 3), jnp.float32) * s2,
        "body_b2": jax.random.normal(ks[3], (c_feat,), jnp.float32) * 0.01,
        "head_w": jax.random.normal(ks[4], (d_desc, c_feat, 1, 1), jnp.float32) * s3,
        "head_b": jax.random.normal(ks[5], (d_desc,), jnp.float32) * 0.01,
    }


def local_net_forward(params, img, kpts, do_loss=False, do_prediction=True):
    """Mirrors localNet.forward (prediction branch).

    img : [B, C, H, W] f32 (NCHW, like PyTorch)
    kpts: [B, N, 2] int32 (x, y) pixel coordinates (clamped into the image)
    returns (loss, pred) dicts, like the PyTorch module.
    """
    # TODO(synk): augment / pad_packed_images handle packed variable-size image
    # lists; with fixed-size batched tensors they are the identity.
    if do_loss:
        # TODO(synk): local_algo.training needs epipolar geometry from
        # intrinsics/extrinsics; not reproducible as a synthetic kernel.
        local_loss, local_pred = None, None
    elif do_prediction:
        local_pred = _fused_local_inference(params, img, kpts)
        local_loss = None
    else:
        local_pred, local_loss = None, None

    loss = {"local_loss": local_loss}
    pred = {"local_pred": local_pred}
    return loss, pred


# -----------------------------------------------------------------------------
# Pure-JAX f32 reference (correctness check only)
# -----------------------------------------------------------------------------
def _reference_forward(params, img, kpts):
    dn = ("NCHW", "OIHW", "NCHW")
    x = jax.lax.conv_general_dilated(img, params["body_w1"], (1, 1), "SAME",
                                     dimension_numbers=dn)
    x = jax.nn.relu(x + params["body_b1"][None, :, None, None])
    x = jax.lax.conv_general_dilated(x, params["body_w2"], (1, 1), "SAME",
                                     dimension_numbers=dn)
    x = jax.nn.relu(x + params["body_b2"][None, :, None, None])
    f = jax.lax.conv_general_dilated(x, params["head_w"], (1, 1), "SAME",
                                     dimension_numbers=dn)
    f = f + params["head_b"][None, :, None, None]               # (B, D, H, W)
    B, D, H, W = f.shape
    f = f.transpose(0, 2, 3, 1).reshape(B, H * W, D)
    idx = jnp.clip(kpts[..., 1] * W + kpts[..., 0], 0, H * W - 1).astype(jnp.int32)
    g = jnp.take_along_axis(f, idx[..., None], axis=1)          # (B, N, D)
    return g * jax.lax.rsqrt(jnp.sum(g * g, -1, keepdims=True) + 1e-12)


if __name__ == "__main__":
    key = jax.random.PRNGKey(0)
    k_img, k_kpt = jax.random.split(key)

    B, C, H, W = 2, 4, 16, 16
    N_KPTS = 8
    D_DESC = 32

    img = jax.random.normal(k_img, (B, C, H, W), jnp.float32)
    kpts = jax.random.randint(k_kpt, (B, N_KPTS, 2), 0, 16, jnp.int32)  # (x, y)

    params = init_params(jax.random.PRNGKey(42), c_in=C, d_desc=D_DESC)

    loss, pred = local_net_forward(params, img, kpts,
                                   do_loss=False, do_prediction=True)
    desc = jax.block_until_ready(pred["local_pred"])

    assert desc.shape == (B, N_KPTS, D_DESC)
    # descriptors must be L2-normalized
    norms = jnp.linalg.norm(desc, axis=-1)
    assert bool(jnp.all(jnp.abs(norms - 1.0) < 1e-3))
    # bf16-MXU kernel vs f32 XLA reference: unit-descriptor cosine similarity
    ref = _reference_forward(params, img, kpts)
    cos = jnp.sum(desc * ref, axis=-1)
    assert bool(jnp.all(cos > 0.97)), cos
    assert loss["local_loss"] is None

    print("KERNEL_OK")
</pallas_src>

<mosaic_0001>
module attributes {stable_mosaic.version = 11 : i64} {
  func.func @_local_net_kernel(%arg0: i32, %arg1: i32, %arg2: memref<2x8xi32, #tpu.memory_space<smem>>, %arg3: memref<1x128x100xbf16, #tpu.memory_space<vmem>>, %arg4: memref<128x144xbf16, #tpu.memory_space<vmem>>, %arg5: memref<100x144xbf16, #tpu.memory_space<vmem>>, %arg6: memref<1x144xf32, #tpu.memory_space<vmem>>, %arg7: memref<144x16xbf16, #tpu.memory_space<vmem>>, %arg8: memref<1x16xf32, #tpu.memory_space<vmem>>, %arg9: memref<16x32xbf16, #tpu.memory_space<vmem>>, %arg10: memref<1x32xf32, #tpu.memory_space<vmem>>, %arg11: memref<1x8x32xf32, #tpu.memory_space<vmem>>, %arg12: memref<8x16xf32, #tpu.memory_space<vmem>>) attributes {dimension_semantics = [#tpu.dimension_semantics<parallel>, #tpu.dimension_semantics<arbitrary>], iteration_bounds = array<i64: 2, 2>, scalar_prefetch = 1 : i64, scratch_operands = 1 : i64, tpu.core_type = #tpu.core_type<tc>, window_params = [{transform_indices = @transform_0, window_bounds = array<i64: 1, 128, 100>}, {transform_indices = @transform_1, window_bounds = array<i64: 128, 144>}, {pipeline_mode = #tpu.pipeline_mode<synchronous>, transform_indices = @transform_2, window_bounds = array<i64: 100, 144>}, {pipeline_mode = #tpu.pipeline_mode<synchronous>, transform_indices = @transform_3, window_bounds = array<i64: 1, 144>}, {pipeline_mode = #tpu.pipeline_mode<synchronous>, transform_indices = @transform_4, window_bounds = array<i64: 144, 16>}, {pipeline_mode = #tpu.pipeline_mode<synchronous>, transform_indices = @transform_5, window_bounds = array<i64: 1, 16>}, {pipeline_mode = #tpu.pipeline_mode<synchronous>, transform_indices = @transform_6, window_bounds = array<i64: 16, 32>}, {pipeline_mode = #tpu.pipeline_mode<synchronous>, transform_indices = @transform_7, window_bounds = array<i64: 1, 32>}, {transform_indices = @transform_8, window_bounds = array<i64: 1, 8, 32>}]} {
    %c0_i32 = arith.constant 0 : i32
    %0 = arith.cmpi eq, %arg1, %c0_i32 : i32
    %1 = arith.extui %0 : i1 to i32
    %c0_i32_0 = arith.constant 0 : i32
    %2 = arith.cmpi ne, %1, %c0_i32_0 : i32
    scf.if %2 {
      %cst_49 = arith.constant 0.000000e+00 : f32
      %126 = vector.broadcast %cst_49 : f32 to vector<8x16xf32>
      %c0_50 = arith.constant 0 : index
      %c0_51 = arith.constant 0 : index
      %127 = vector.load %arg12[%c0_50, %c0_51] : memref<8x16xf32, #tpu.memory_space<vmem>>, vector<8x16xf32>
      tpu.vector_store %arg12[%c0_50, %c0_51], %126 {strides = array<i32>} : memref<8x16xf32, #tpu.memory_space<vmem>>, vector<8x16xf32>,
    } else {
    }
    %c0 = arith.constant 0 : index
    %c0_1 = arith.constant 0 : index
    %c0_2 = arith.constant 0 : index
    %3 = vector.load %arg3[%c0, %c0_1, %c0_2] : memref<1x128x100xbf16, #tpu.memory_space<vmem>>, vector<1x128x100xbf16>
    %4 = vector.shape_cast %3 : vector<1x128x100xbf16> to vector<128x100xbf16>
    %c0_3 = arith.constant 0 : index
    %c0_4 = arith.constant 0 : index
    %5 = vector.load %arg5[%c0_3, %c0_4] : memref<100x144xbf16, #tpu.memory_space<vmem>>, vector<100x144xbf16>
    %cst = arith.constant dense<0.000000e+00> : vector<128x144xf32>
    %6 = tpu.matmul %4, %5, %cst {dimension_numbers = #tpu.dot_dimension_numbers<[1], [0], [0], [1], [0, 0, 1, 1], [], []>} : vector<128x100xbf16>, vector<100x144xbf16>, vector<128x144xf32> -> vector<128x144xf32>
    %c0_5 = arith.constant 0 : index
    %c0_6 = arith.constant 0 : index
    %7 = vector.load %arg6[%c0_5, %c0_6] : memref<1x144xf32, #tpu.memory_space<vmem>>, vector<1x144xf32>
    %8 = vector.broadcast %7 : vector<1x144xf32> to vector<128x144xf32>
    %9 = arith.addf %6, %8 : vector<128x144xf32>
    %cst_7 = arith.constant 0.000000e+00 : f32
    %10 = vector.broadcast %cst_7 : f32 to vector<128x144xf32>
    %11 = arith.maximumf %9, %10 : vector<128x144xf32>
    %c0_8 = arith.constant 0 : index
    %c0_9 = arith.constant 0 : index
    %12 = vector.load %arg4[%c0_8, %c0_9] : memref<128x144xbf16, #tpu.memory_space<vmem>>, vector<128x144xbf16>
    %13 = arith.extf %12 : vector<128x144xbf16> to vector<128x144xf32>
    %14 = arith.mulf %11, %13 : vector<128x144xf32>
    %15 = arith.truncf %14 : vector<128x144xf32> to vector<128x144xbf16>
    %c0_10 = arith.constant 0 : index
    %c0_11 = arith.constant 0 : index
    %16 = vector.load %arg7[%c0_10, %c0_11] : memref<144x16xbf16, #tpu.memory_space<vmem>>, vector<144x16xbf16>
    %cst_12 = arith.constant dense<0.000000e+00> : vector<128x16xf32>
    %17 = tpu.matmul %15, %16, %cst_12 {dimension_numbers = #tpu.dot_dimension_numbers<[1], [0], [0], [1], [0, 0, 1, 1], [], []>} : vector<128x144xbf16>, vector<144x16xbf16>, vector<128x16xf32> -> vector<128x16xf32>
    %c0_13 = arith.constant 0 : index
    %c0_14 = arith.constant 0 : index
    %18 = vector.load %arg8[%c0_13, %c0_14] : memref<1x16xf32, #tpu.memory_space<vmem>>, vector<1x16xf32>
    %19 = vector.broadcast %18 : vector<1x16xf32> to vector<128x16xf32>
    %20 = arith.addf %17, %19 : vector<128x16xf32>
    %cst_15 = arith.constant 0.000000e+00 : f32
    %21 = vector.broadcast %cst_15 : f32 to vector<128x16xf32>
    %22 = arith.maximumf %20, %21 : vector<128x16xf32>
    %23 = tpu.iota {dimensions = array<i32: 0>} : vector<8x128xi32>
    %24 = tpu.iota {dimensions = array<i32: 1>} : vector<8x128xi32>
    %c128_i32 = arith.constant 128 : i32
    %25 = arith.muli %arg1, %c128_i32 : i32
    %26 = vector.broadcast %25 : i32 to vector<8x128xi32>
    %27 = arith.addi %24, %26 : vector<8x128xi32>
    %cst_16 = arith.constant 0.000000e+00 : f32
    %28 = vector.broadcast %cst_16 : f32 to vector<8x128xf32>
    %29 = arith.index_cast %arg0 : i32 to index
    %c0_17 = arith.constant 0 : index
    %30 = memref.load %arg2[%29, %c0_17] : memref<2x8xi32, #tpu.memory_space<smem>>
    %c0_i32_18 = arith.constant 0 : i32
    %c255_i32 = arith.constant 255 : i32
    %31 = arith.maxsi %c0_i32_18, %30 : i32
    %32 = arith.minsi %c255_i32, %31 : i32
    %c0_i32_19 = arith.constant 0 : i32
    %33 = vector.broadcast %c0_i32_19 : i32 to vector<8x128xi32>
    %34 = arith.cmpi eq, %23, %33 : vector<8x128xi32>
    %35 = vector.broadcast %32 : i32 to vector<8x128xi32>
    %36 = arith.cmpi eq, %27, %35 : vector<8x128xi32>
    %37 = arith.andi %34, %36 : vector<8x128xi1>
    %cst_20 = arith.constant 1.000000e+00 : f32
    %38 = vector.broadcast %cst_20 : f32 to vector<8x128xf32>
    %39 = arith.select %37, %38, %28 : vector<8x128xi1>, vector<8x128xf32>
    %40 = arith.index_cast %arg0 : i32 to index
    %c1 = arith.constant 1 : index
    %41 = memref.load %arg2[%40, %c1] : memref<2x8xi32, #tpu.memory_space<smem>>
    %c0_i32_21 = arith.constant 0 : i32
    %c255_i32_22 = arith.constant 255 : i32
    %42 = arith.maxsi %c0_i32_21, %41 : i32
    %43 = arith.minsi %c255_i32_22, %42 : i32
    %c1_i32 = arith.constant 1 : i32
    %44 = vector.broadcast %c1_i32 : i32 to vector<8x128xi32>
    %45 = arith.cmpi eq, %23, %44 : vector<8x128xi32>
    %46 = vector.broadcast %43 : i32 to vector<8x128xi32>
    %47 = arith.cmpi eq, %27, %46 : vector<8x128xi32>
    %48 = arith.andi %45, %47 : vector<8x128xi1>
    %cst_23 = arith.constant 1.000000e+00 : f32
    %49 = vector.broadcast %cst_23 : f32 to vector<8x128xf32>
    %50 = arith.select %48, %49, %39 : vector<8x128xi1>, vector<8x128xf32>
    %51 = arith.index_cast %arg0 : i32 to index
    %c2 = arith.constant 2 : index
    %52 = memref.load %arg2[%51, %c2] : memref<2x8xi32, #tpu.memory_space<smem>>
    %c0_i32_24 = arith.constant 0 : i32
    %c255_i32_25 = arith.constant 255 : i32
    %53 = arith.maxsi %c0_i32_24, %52 : i32
    %54 = arith.minsi %c255_i32_25, %53 : i32
    %c2_i32 = arith.constant 2 : i32
    %55 = vector.broadcast %c2_i32 : i32 to vector<8x128xi32>
    %56 = arith.cmpi eq, %23, %55 : vector<8x128xi32>
    %57 = vector.broadcast %54 : i32 to vector<8x128xi32>
    %58 = arith.cmpi eq, %27, %57 : vector<8x128xi32>
    %59 = arith.andi %56, %58 : vector<8x128xi1>
    %cst_26 = arith.constant 1.000000e+00 : f32
    %60 = vector.broadcast %cst_26 : f32 to vector<8x128xf32>
    %61 = arith.select %59, %60, %50 : vector<8x128xi1>, vector<8x128xf32>
    %62 = arith.index_cast %arg0 : i32 to index
    %c3 = arith.constant 3 : index
    %63 = memref.load %arg2[%62, %c3] : memref<2x8xi32, #tpu.memory_space<smem>>
    %c0_i32_27 = arith.constant 0 : i32
    %c255_i32_28 = arith.constant 255 : i32
    %64 = arith.maxsi %c0_i32_27, %63 : i32
    %65 = arith.minsi %c255_i32_28, %64 : i32
    %c3_i32 = arith.constant 3 : i32
    %66 = vector.broadcast %c3_i32 : i32 to vector<8x128xi32>
    %67 = arith.cmpi eq, %23, %66 : vector<8x128xi32>
    %68 = vector.broadcast %65 : i32 to vector<8x128xi32>
    %69 = arith.cmpi eq, %27, %68 : vector<8x128xi32>
    %70 = arith.andi %67, %69 : vector<8x128xi1>
    %cst_29 = arith.constant 1.000000e+00 : f32
    %71 = vector.broadcast %cst_29 : f32 to vector<8x128xf32>
    %72 = arith.select %70, %71, %61 : vector<8x128xi1>, vector<8x128xf32>
    %73 = arith.index_cast %arg0 : i32 to index
    %c4 = arith.constant 4 : index
    %74 = memref.load %arg2[%73, %c4] : memref<2x8xi32, #tpu.memory_space<smem>>
    %c0_i32_30 = arith.constant 0 : i32
    %c255_i32_31 = arith.constant 255 : i32
    %75 = arith.maxsi %c0_i32_30, %74 : i32
    %76 = arith.minsi %c255_i32_31, %75 : i32
    %c4_i32 = arith.constant 4 : i32
    %77 = vector.broadcast %c4_i32 : i32 to vector<8x128xi32>
    %78 = arith.cmpi eq, %23, %77 : vector<8x128xi32>
    %79 = vector.broadcast %76 : i32 to vector<8x128xi32>
    %80 = arith.cmpi eq, %27, %79 : vector<8x128xi32>
    %81 = arith.andi %78, %80 : vector<8x128xi1>
    %cst_32 = arith.constant 1.000000e+00 : f32
    %82 = vector.broadcast %cst_32 : f32 to vector<8x128xf32>
    %83 = arith.select %81, %82, %72 : vector<8x128xi1>, vector<8x128xf32>
    %84 = arith.index_cast %arg0 : i32 to index
    %c5 = arith.constant 5 : index
    %85 = memref.load %arg2[%84, %c5] : memref<2x8xi32, #tpu.memory_space<smem>>
    %c0_i32_33 = arith.constant 0 : i32
    %c255_i32_34 = arith.constant 255 : i32
    %86 = arith.maxsi %c0_i32_33, %85 : i32
    %87 = arith.minsi %c255_i32_34, %86 : i32
    %c5_i32 = arith.constant 5 : i32
    %88 = vector.broadcast %c5_i32 : i32 to vector<8x128xi32>
    %89 = arith.cmpi eq, %23, %88 : vector<8x128xi32>
    %90 = vector.broadcast %87 : i32 to vector<8x128xi32>
    %91 = arith.cmpi eq, %27, %90 : vector<8x128xi32>
    %92 = arith.andi %89, %91 : vector<8x128xi1>
    %cst_35 = arith.constant 1.000000e+00 : f32
    %93 = vector.broadcast %cst_35 : f32 to vector<8x128xf32>
    %94 = arith.select %92, %93, %83 : vector<8x128xi1>, vector<8x128xf32>
    %95 = arith.index_cast %arg0 : i32 to index
    %c6 = arith.constant 6 : index
    %96 = memref.load %arg2[%95, %c6] : memref<2x8xi32, #tpu.memory_space<smem>>
    %c0_i32_36 = arith.constant 0 : i32
    %c255_i32_37 = arith.constant 255 : i32
    %97 = arith.maxsi %c0_i32_36, %96 : i32
    %98 = arith.minsi %c255_i32_37, %97 : i32
    %c6_i32 = arith.constant 6 : i32
    %99 = vector.broadcast %c6_i32 : i32 to vector<8x128xi32>
    %100 = arith.cmpi eq, %23, %99 : vector<8x128xi32>
    %101 = vector.broadcast %98 : i32 to vector<8x128xi32>
    %102 = arith.cmpi eq, %27, %101 : vector<8x128xi32>
    %103 = arith.andi %100, %102 : vector<8x128xi1>
    %cst_38 = arith.constant 1.000000e+00 : f32
    %104 = vector.broadcast %cst_38 : f32 to vector<8x128xf32>
    %105 = arith.select %103, %104, %94 : vector<8x128xi1>, vector<8x128xf32>
    %106 = arith.index_cast %arg0 : i32 to index
    %c7 = arith.constant 7 : index
    %107 = memref.load %arg2[%106, %c7] : memref<2x8xi32, #tpu.memory_space<smem>>
    %c0_i32_39 = arith.constant 0 : i32
    %c255_i32_40 = arith.constant 255 : i32
    %108 = arith.maxsi %c0_i32_39, %107 : i32
    %109 = arith.minsi %c255_i32_40, %108 : i32
    %c7_i32 = arith.constant 7 : i32
    %110 = vector.broadcast %c7_i32 : i32 to vector<8x128xi32>
    %111 = arith.cmpi eq, %23, %110 : vector<8x128xi32>
    %112 = vector.broadcast %109 : i32 to vector<8x128xi32>
    %113 = arith.cmpi eq, %27, %112 : vector<8x128xi32>
    %114 = arith.andi %111, %113 : vector<8x128xi1>
    %cst_41 = arith.constant 1.000000e+00 : f32
    %115 = vector.broadcast %cst_41 : f32 to vector<8x128xf32>
    %116 = arith.select %114, %115, %105 : vector<8x128xi1>, vector<8x128xf32>
    %c0_42 = arith.constant 0 : index
    %c0_43 = arith.constant 0 : index
    %117 = vector.load %arg12[%c0_42, %c0_43] : memref<8x16xf32, #tpu.memory_space<vmem>>, vector<8x16xf32>
    %118 = arith.truncf %116 : vector<8x128xf32> to vector<8x128xbf16>
    %119 = arith.truncf %22 : vector<128x16xf32> to vector<128x16xbf16>
    %cst_44 = arith.constant dense<0.000000e+00> : vector<8x16xf32>
    %120 = tpu.matmul %118, %119, %cst_44 {dimension_numbers = #tpu.dot_dimension_numbers<[1], [0], [0], [1], [0, 0, 1, 1], [], []>} : vector<8x128xbf16>, vector<128x16xbf16>, vector<8x16xf32> -> vector<8x16xf32>
    %121 = arith.addf %117, %120 : vector<8x16xf32>
    %c0_45 = arith.constant 0 : index
    %c0_46 = arith.constant 0 : index
    %122 = vector.load %arg12[%c0_45, %c0_46] : memref<8x16xf32, #tpu.memory_space<vmem>>, vector<8x16xf32>
    tpu.vector_store %arg12[%c0_45, %c0_46], %121 {strides = array<i32>} : memref<8x16xf32, #tpu.memory_space<vmem>>, vector<8x16xf32>,
    %c1_i32_47 = arith.constant 1 : i32
    %123 = arith.cmpi eq, %arg1, %c1_i32_47 : i32
    %124 = arith.extui %123 : i1 to i32
    %c0_i32_48 = arith.constant 0 : i32
    %125 = arith.cmpi ne, %124, %c0_i32_48 : i32
    scf.if %125 {
      %c0_49 = arith.constant 0 : index
      %c0_50 = arith.constant 0 : index
      %126 = vector.load %arg12[%c0_49, %c0_50] : memref<8x16xf32, #tpu.memory_space<vmem>>, vector<8x16xf32>
      %127 = arith.truncf %126 : vector<8x16xf32> to vector<8x16xbf16>
      %c0_51 = arith.constant 0 : index
      %c0_52 = arith.constant 0 : index
      %128 = vector.load %arg9[%c0_51, %c0_52] : memref<16x32xbf16, #tpu.memory_space<vmem>>, vector<16x32xbf16>
      %cst_53 = arith.constant dense<0.000000e+00> : vector<8x32xf32>
      %129 = tpu.matmul %127, %128, %cst_53 {dimension_numbers = #tpu.dot_dimension_numbers<[1], [0], [0], [1], [0, 0, 1, 1], [], []>} : vector<8x16xbf16>, vector<16x32xbf16>, vector<8x32xf32> -> vector<8x32xf32>
      %c0_54 = arith.constant 0 : index
      %c0_55 = arith.constant 0 : index
      %130 = vector.load %arg10[%c0_54, %c0_55] : memref<1x32xf32, #tpu.memory_space<vmem>>, vector<1x32xf32>
      %131 = vector.broadcast %130 : vector<1x32xf32> to vector<8x32xf32>
      %132 = arith.addf %129, %131 : vector<8x32xf32>
      %133 = arith.mulf %132, %132 : vector<8x32xf32>
      %cst_56 = arith.constant dense<0.000000e+00> : vector<8xf32>
      %134 = vector.multi_reduction <add>, %133, %cst_56 [1] : vector<8x32xf32> to vector<8xf32>
      %135 = vector.shape_cast %134 : vector<8xf32> to vector<8x1xf32>
      %cst_57 = arith.constant 9.99999996E-13 : f32
      %136 = vector.broadcast %cst_57 : f32 to vector<8x1xf32>
      %137 = arith.addf %135, %136 : vector<8x1xf32>
      %138 = math.rsqrt %137 : vector<8x1xf32>
      %139 = vector.broadcast %138 : vector<8x1xf32> to vector<8x32xf32>
      %140 = arith.mulf %132, %139 : vector<8x32xf32>
      %c0_58 = arith.constant 0 : index
      %c0_59 = arith.constant 0 : index
      %c0_60 = arith.constant 0 : index
      %141 = vector.load %arg11[%c0_58, %c0_59, %c0_60] : memref<1x8x32xf32, #tpu.memory_space<vmem>>, vector<1x8x32xf32>
      %142 = vector.shape_cast %141 : vector<1x8x32xf32> to vector<8x32xf32>
      %143 = vector.shape_cast %140 : vector<8x32xf32> to vector<1x8x32xf32>
      tpu.vector_store %arg11[%c0_58, %c0_59, %c0_60], %143 {strides = array<i32>} : memref<1x8x32xf32, #tpu.memory_space<vmem>>, vector<1x8x32xf32>,
    } else {
    }
    return
  }
  func.func @transform_0(%arg0: i32, %arg1: i32, %arg2: memref<2x8xi32, #tpu.memory_space<smem>>) -> (i32, i32, i32) {
    %c0_i32 = arith.constant 0 : i32
    %c0_i32_0 = arith.constant 0 : i32
    return %arg0, %arg1, %c0_i32 : i32, i32, i32
  }
  func.func @transform_1(%arg0: i32, %arg1: i32, %arg2: memref<2x8xi32, #tpu.memory_space<smem>>) -> (i32, i32) {
    %c0_i32 = arith.constant 0 : i32
    %c0_i32_0 = arith.constant 0 : i32
    return %arg1, %c0_i32 : i32, i32
  }
  func.func @transform_2(%arg0: i32, %arg1: i32, %arg2: memref<2x8xi32, #tpu.memory_space<smem>>) -> (i32, i32) {
    %c0_i32 = arith.constant 0 : i32
    %c0_i32_0 = arith.constant 0 : i32
    %c0_i32_1 = arith.constant 0 : i32
    return %c0_i32, %c0_i32_0 : i32, i32
  }
  func.func @transform_3(%arg0: i32, %arg1: i32, %arg2: memref<2x8xi32, #tpu.memory_space<smem>>) -> (i32, i32) {
    %c0_i32 = arith.constant 0 : i32
    %c0_i32_0 = arith.constant 0 : i32
    %c0_i32_1 = arith.constant 0 : i32
    return %c0_i32, %c0_i32_0 : i32, i32
  }
  func.func @transform_4(%arg0: i32, %arg1: i32, %arg2: memref<2x8xi32, #tpu.memory_space<smem>>) -> (i32, i32) {
    %c0_i32 = arith.constant 0 : i32
    %c0_i32_0 = arith.constant 0 : i32
    %c0_i32_1 = arith.constant 0 : i32
    return %c0_i32, %c0_i32_0 : i32, i32
  }
  func.func @transform_5(%arg0: i32, %arg1: i32, %arg2: memref<2x8xi32, #tpu.memory_space<smem>>) -> (i32, i32) {
    %c0_i32 = arith.constant 0 : i32
    %c0_i32_0 = arith.constant 0 : i32
    %c0_i32_1 = arith.constant 0 : i32
    return %c0_i32, %c0_i32_0 : i32, i32
  }
  func.func @transform_6(%arg0: i32, %arg1: i32, %arg2: memref<2x8xi32, #tpu.memory_space<smem>>) -> (i32, i32) {
    %c0_i32 = arith.constant 0 : i32
    %c0_i32_0 = arith.constant 0 : i32
    %c0_i32_1 = arith.constant 0 : i32
    return %c0_i32, %c0_i32_0 : i32, i32
  }
  func.func @transform_7(%arg0: i32, %arg1: i32, %arg2: memref<2x8xi32, #tpu.memory_space<smem>>) -> (i32, i32) {
    %c0_i32 = arith.constant 0 : i32
    %c0_i32_0 = arith.constant 0 : i32
    %c0_i32_1 = arith.constant 0 : i32
    return %c0_i32, %c0_i32_0 : i32, i32
  }
  func.func @transform_8(%arg0: i32, %arg1: i32, %arg2: memref<2x8xi32, #tpu.memory_space<smem>>) -> (i32, i32, i32) {
    %c0_i32 = arith.constant 0 : i32
    %c0_i32_0 = arith.constant 0 : i32
    %c0_i32_1 = arith.constant 0 : i32
    return %arg0, %c0_i32, %c0_i32_0 : i32, i32, i32
  }
}

</mosaic_0001>

<llo_original>
// kernel: tpu_custom_call.1
$region0: #{tpu_custom_call.1}
  #allocation0 [shape = 'u32[]', space=smem, size = 0x4, offset = 0x4, fixed_abs, tag = 'smem constant byte address 0x4 - core index']
  #allocation1 [shape = 'u32[144,128]{1,0:T(1,128)}', space=vmem, size = 0x12000, scoped, tag = 'internal scratch']
  #allocation2 [shape = 'f32[8,16]{1,0:T(8,128)}', space=vmem, size = 0x1000, scoped, tag = 'scratch operand']
  #allocation3 [shape = 's32[1]{0}', space=sflag, size = 0x4, scoped, tag = 'scoped memory for tpu_custom_call.1']
  #allocation4 [shape = 'u8[1024]{0}', space=smem, size = 0x400, scoped, tag = 'prefetched SMEM operand 0']
  %s0 = inlined_call_operand.vmem [shape: s32[2,8], index: 0, kind: input, shape index: {}]
  %s1 = inlined_call_operand.vmem [shape: bf16[2,256,100], index: 1, kind: input, shape index: {}]
  %s2 = inlined_call_operand.vmem [shape: bf16[256,144], index: 2, kind: input, shape index: {}]
  %s3 = inlined_call_operand.vmem [shape: bf16[100,144], index: 3, kind: input, shape index: {}]
  %s4 = inlined_call_operand.vmem [shape: f32[1,144], index: 4, kind: input, shape index: {}]
  %s5 = inlined_call_operand.vmem [shape: bf16[144,16], index: 5, kind: input, shape index: {}]
  %s6 = inlined_call_operand.vmem [shape: f32[1,16], index: 6, kind: input, shape index: {}]
  %s7 = inlined_call_operand.vmem [shape: bf16[16,32], index: 7, kind: input, shape index: {}]
  %s8 = inlined_call_operand.vmem [shape: f32[1,32], index: 8, kind: input, shape index: {}]
  %s9 = inlined_call_operand.hbm [shape: f32[2,8,32], index: 9, kind: output, shape index: {}]
  %s10 = sld [smem:[#allocation0]]
  $region73: #{tpu_custom_call.1} parent=0
    _
  %s12 = ssub.s32 1, %s10
  %s13 = scalar_select 0, %s12, %s10
  %s14 = sshll.u32 %s0, 4
  %s15 = int_to_ptr.vmem [resolvable:$true] %s14
  %17 = dma.vmem_to_smem %s15, 32, [#allocation4], [#allocation3]
  %18 = dma.done [#allocation3], 32
  %19 = sfence
  $region1: #{tpu_custom_call.1} parent=0
    #allocation5 [shape = 'u8[8192]{0}', space=vmem, size = 0x2000, scoped, tag = 'output window, operand 0']
    #allocation6 [shape = 's32[2]{0}', space=sflag, size = 0x8, scoped, tag = 'scoped memory for tpu_custom_call.1']
    %20 = vsyncpa [#allocation6], 0
    %s21 = scalar_lea.sflag [#allocation6], 1
    %22 = vsyncpa %s21, 0
    loop: start=0, step=1, limit=6
    $region2: #{tpu_custom_call.1} parent=1 // loop_pre_header
      _
    $region3: #{tpu_custom_call.1} parent=1 // loop_header
      %s24 = sphi 0, %s28
      %p25 = scmp.ge.s32.totalorder %s24, 6
      %s31 = sphi 0, %s43
      %s32 = sphi 0, %s39
      %s33 = sphi 0, %s31
      %s34 = sphi 0, %s32
      %s35 = sphi 0, %s33
      %s36 = sphi 0, %s34
      %s48 = sphi 0, %s50
      %s51 = sphi 0, %s48
      %s52 = sphi 0, %s51
      %s68 = sphi 0, %s52
      %s74 = sphi 0, %s76
      %s77 = sphi 0, %s74
      %s78 = sphi 0, %s77
      %s94 = sphi 0, %s78
      %s98 = sphi 0, %s98
      %s100 = sphi 0, %s98
      %s101 = sphi 0, %s100
      %s115 = sphi 0, %s101
      %s119 = sphi 0, %s119
      %s121 = sphi 0, %s119
      %s122 = sphi 0, %s121
      %s136 = sphi 0, %s122
      %s140 = sphi 0, %s140
      %s142 = sphi 0, %s140
      %s143 = sphi 0, %s142
      %s157 = sphi 0, %s143
      %s161 = sphi 0, %s161
      %s163 = sphi 0, %s161
      %s164 = sphi 0, %s163
      %s178 = sphi 0, %s164
      %s182 = sphi 0, %s182
      %s184 = sphi 0, %s182
      %s185 = sphi 0, %s184
      %s199 = sphi 0, %s185
      %s203 = sphi 0, %s203
      %s205 = sphi 0, %s203
      %s206 = sphi 0, %s205
      %s220 = sphi 0, %s206
      %s226 = sphi 0, %s228
      %s229 = sphi 0, %s226
      %s230 = sphi 0, %s229
      %s246 = sphi 0, %s230
    $region4: #{tpu_custom_call.1} parent=1 // loop_header_branch
      %27 = sbr.rel (%p25) target = $region8
    $region5: #{tpu_custom_call.1} parent=1 // loop_body
      %s29 = ssub.s32 %s24, 1
      %s30 = ssub.s32 %s24, 2
      %s37 = sadd.s32 1, %s32
      %p38 = scmp.ge.s32.totalorder %s37, 2
      %s39 = scalar_select %p38, 0, %s37
      %s40 = sadd.s32 1, %s31
      %s41 = scalar_select %p38, %s40, %s31
      %p42 = scmp.ge.s32.totalorder %s41, 2
      %s43 = scalar_select %p42, 0, %s41
      %s44 = ssub.s32 %s31, %s43
      %s45 = ssub.s32 %s32, %s39
      %s46 = sor.u32 %s44, %s45
      %p47 = scmp.eq.s32.totalorder %s46, 0
      %s49 = sadd.s32 %s48, 1
      %s50 = scalar_select %p47, %s48, %s49
      %p53 = pneg %p47
      %p54 = scmp.eq.s32.totalorder %s24, 3
      %p55 = por %p53, %p54
      %p56 = scmp.ne.s32.totalorder %s48, %s51
      %p57 = scmp.eq.s32.totalorder %s24, 0
      %p58 = por %p56, %p57
      %p59 = scmp.ne.s32.totalorder %s48, %s51
      %p60 = scmp.eq.s32.totalorder %s29, 3
      %p61 = por %p59, %p60
      %p62 = scmp.ne.s32.totalorder %s51, %s52
      %p63 = scmp.eq.s32.totalorder %s29, 0
      %p64 = por %p62, %p63
      %p65 = scmp.ne.s32.totalorder %s51, %s52
      %p66 = scmp.eq.s32.totalorder %s30, 3
      %p67 = por %p65, %p66
      %p69 = scmp.ne.s32.totalorder %s52, %s68
      %p70 = scmp.eq.s32.totalorder %s30, 0
      %p71 = por %p69, %p70
      %s72 = ssub.s32 %s32, %s39
      %p73 = scmp.eq.s32.totalorder %s72, 0
      %s75 = sadd.s32 %s74, 1
      %s76 = scalar_select %p73, %s74, %s75
      %p79 = pneg %p73
      %p80 = scmp.eq.s32.totalorder %s24, 3
      %p81 = por %p79, %p80
      %p82 = scmp.ne.s32.totalorder %s74, %s77
      %p83 = scmp.eq.s32.totalorder %s24, 0
      %p84 = por %p82, %p83
      %p85 = scmp.ne.s32.totalorder %s74, %s77
      %p86 = scmp.eq.s32.totalorder %s29, 3
      %p87 = por %p85, %p86
      %p88 = scmp.ne.s32.totalorder %s77, %s78
      %p89 = scmp.eq.s32.totalorder %s29, 0
      %p90 = por %p88, %p89
      %p91 = scmp.ne.s32.totalorder %s77, %s78
      %p92 = scmp.eq.s32.totalorder %s30, 3
      %p93 = por %p91, %p92
      %p95 = scmp.ne.s32.totalorder %s78, %s94
      %p96 = scmp.eq.s32.totalorder %s30, 0
      %p97 = por %p95, %p96
      %s99 = sadd.s32 %s98, 1
      %p102 = scmp.eq.s32.totalorder %s24, 3
      %p103 = scmp.ne.s32.totalorder %s98, %s100
      %p104 = scmp.eq.s32.totalorder %s24, 0
      %p105 = por %p103, %p104
      %p106 = scmp.ne.s32.totalorder %s98, %s100
      %p107 = scmp.eq.s32.totalorder %s29, 3
      %p108 = por %p106, %p107
      %p109 = scmp.ne.s32.totalorder %s100, %s101
      %p110 = scmp.eq.s32.totalorder %s29, 0
      %p111 = por %p109, %p110
      %p112 = scmp.ne.s32.totalorder %s100, %s101
      %p113 = scmp.eq.s32.totalorder %s30, 3
      %p114 = por %p112, %p113
      %p116 = scmp.ne.s32.totalorder %s101, %s115
      %p117 = scmp.eq.s32.totalorder %s30, 0
      %p118 = por %p116, %p117
      %s120 = sadd.s32 %s119, 1
      %p123 = scmp.eq.s32.totalorder %s24, 3
      %p124 = scmp.ne.s32.totalorder %s119, %s121
      %p125 = scmp.eq.s32.totalorder %s24, 0
      %p126 = por %p124, %p125
      %p127 = scmp.ne.s32.totalorder %s119, %s121
      %p128 = scmp.eq.s32.totalorder %s29, 3
      %p129 = por %p127, %p128
      %p130 = scmp.ne.s32.totalorder %s121, %s122
      %p131 = scmp.eq.s32.totalorder %s29, 0
      %p132 = por %p130, %p131
      %p133 = scmp.ne.s32.totalorder %s121, %s122
      %p134 = scmp.eq.s32.totalorder %s30, 3
      %p135 = por %p133, %p134
      %p137 = scmp.ne.s32.totalorder %s122, %s136
      %p138 = scmp.eq.s32.totalorder %s30, 0
      %p139 = por %p137, %p138
      %s141 = sadd.s32 %s140, 1
      %p144 = scmp.eq.s32.totalorder %s24, 3
      %p145 = scmp.ne.s32.totalorder %s140, %s142
      %p146 = scmp.eq.s32.totalorder %s24, 0
      %p147 = por %p145, %p146
      %p148 = scmp.ne.s32.totalorder %s140, %s142
      %p149 = scmp.eq.s32.totalorder %s29, 3
      %p150 = por %p148, %p149
      %p151 = scmp.ne.s32.totalorder %s142, %s143
      %p152 = scmp.eq.s32.totalorder %s29, 0
      %p153 = por %p151, %p152
      %p154 = scmp.ne.s32.totalorder %s142, %s143
      %p155 = scmp.eq.s32.totalorder %s30, 3
      %p156 = por %p154, %p155
      %p158 = scmp.ne.s32.totalorder %s143, %s157
      %p159 = scmp.eq.s32.totalorder %s30, 0
      %p160 = por %p158, %p159
      %s162 = sadd.s32 %s161, 1
      %p165 = scmp.eq.s32.totalorder %s24, 3
      %p166 = scmp.ne.s32.totalorder %s161, %s163
      %p167 = scmp.eq.s32.totalorder %s24, 0
      %p168 = por %p166, %p167
      %p169 = scmp.ne.s32.totalorder %s161, %s163
      %p170 = scmp.eq.s32.totalorder %s29, 3
      %p171 = por %p169, %p170
      %p172 = scmp.ne.s32.totalorder %s163, %s164
      %p173 = scmp.eq.s32.totalorder %s29, 0
      %p174 = por %p172, %p173
      %p175 = scmp.ne.s32.totalorder %s163, %s164
      %p176 = scmp.eq.s32.totalorder %s30, 3
      %p177 = por %p175, %p176
      %p179 = scmp.ne.s32.totalorder %s164, %s178
      %p180 = scmp.eq.s32.totalorder %s30, 0
      %p181 = por %p179, %p180
      %s183 = sadd.s32 %s182, 1
      %p186 = scmp.eq.s32.totalorder %s24, 3
      %p187 = scmp.ne.s32.totalorder %s182, %s184
      %p188 = scmp.eq.s32.totalorder %s24, 0
      %p189 = por %p187, %p188
      %p190 = scmp.ne.s32.totalorder %s182, %s184
      %p191 = scmp.eq.s32.totalorder %s29, 3
      %p192 = por %p190, %p191
      %p193 = scmp.ne.s32.totalorder %s184, %s185
      %p194 = scmp.eq.s32.totalorder %s29, 0
      %p195 = por %p193, %p194
      %p196 = scmp.ne.s32.totalorder %s184, %s185
      %p197 = scmp.eq.s32.totalorder %s30, 3
      %p198 = por %p196, %p197
      %p200 = scmp.ne.s32.totalorder %s185, %s199
      %p201 = scmp.eq.s32.totalorder %s30, 0
      %p202 = por %p200, %p201
      %s204 = sadd.s32 %s203, 1
      %p207 = scmp.eq.s32.totalorder %s24, 3
      %p208 = scmp.ne.s32.totalorder %s203, %s205
      %p209 = scmp.eq.s32.totalorder %s24, 0
      %p210 = por %p208, %p209
      %p211 = scmp.ne.s32.totalorder %s203, %s205
      %p212 = scmp.eq.s32.totalorder %s29, 3
      %p213 = por %p211, %p212
      %p214 = scmp.ne.s32.totalorder %s205, %s206
      %p215 = scmp.eq.s32.totalorder %s29, 0
      %p216 = por %p214, %p215
      %p217 = scmp.ne.s32.totalorder %s205, %s206
      %p218 = scmp.eq.s32.totalorder %s30, 3
      %p219 = por %p217, %p218
      %p221 = scmp.ne.s32.totalorder %s206, %s220
      %p222 = scmp.eq.s32.totalorder %s30, 0
      %p223 = por %p221, %p222
      %s224 = ssub.s32 %s31, %s43
      %p225 = scmp.eq.s32.totalorder %s224, 0
      %s227 = sadd.s32 %s226, 1
      %s228 = scalar_select %p225, %s226, %s227
      %p231 = pneg %p225
      %p232 = scmp.eq.s32.totalorder %s24, 3
      %p233 = por %p231, %p232
      %p234 = scmp.ne.s32.totalorder %s226, %s229
      %p235 = scmp.eq.s32.totalorder %s24, 0
      %p236 = por %p234, %p235
      %p237 = scmp.ne.s32.totalorder %s226, %s229
      %p238 = scmp.eq.s32.totalorder %s29, 3
      %p239 = por %p237, %p238
      %p240 = scmp.ne.s32.totalorder %s229, %s230
      %p241 = scmp.eq.s32.totalorder %s29, 0
      %p242 = por %p240, %p241
      %p243 = scmp.ne.s32.totalorder %s229, %s230
      %p244 = scmp.eq.s32.totalorder %s30, 3
      %p245 = por %p243, %p244
      %p247 = scmp.ne.s32.totalorder %s230, %s246
      %p248 = scmp.eq.s32.totalorder %s30, 0
      %p249 = por %p247, %p248
      %p250 = scmp.le.s32.totalorder 1, %s24
      %p251 = scmp.lt.s32.totalorder %s24, 5
      %p252 = pnand %p250, %p251
      %p253 = pneg %p252
      // Predicated region
      $region9: #{tpu_custom_call.1} parent=5 // pred_check
        _
      $region10: #{tpu_custom_call.1} parent=5 // pred_check_branch
        %255 = sbr.rel (%p252) target = $region12
      $region11: #{tpu_custom_call.1} parent=5 // pred_region
        %s256 = ssub.s32 %s24, 1
        // Predicated region
        $region13: #{tpu_custom_call.1} parent=11 // pred_check
          %p257 = pneg %p111
        $region14: #{tpu_custom_call.1} parent=11 // pred_check_branch
          %259 = sbr.rel (%p257) target = $region16
        $region15: #{tpu_custom_call.1} parent=11 // pred_region
          _
        $region16: #{tpu_custom_call.1} parent=11 // pred_fallthru
          _
        // Predicated region
        $region17: #{tpu_custom_call.1} parent=11 // pred_check
          %p260 = pneg %p132
        $region18: #{tpu_custom_call.1} parent=11 // pred_check_branch
          %262 = sbr.rel (%p260) target = $region20
        $region19: #{tpu_custom_call.1} parent=11 // pred_region
          _
        $region20: #{tpu_custom_call.1} parent=11 // pred_fallthru
          _
        // Predicated region
        $region21: #{tpu_custom_call.1} parent=11 // pred_check
          %p263 = pneg %p153
        $region22: #{tpu_custom_call.1} parent=11 // pred_check_branch
          %265 = sbr.rel (%p263) target = $region24
        $region23: #{tpu_custom_call.1} parent=11 // pred_region
          _
        $region24: #{tpu_custom_call.1} parent=11 // pred_fallthru
          _
        // Predicated region
        $region25: #{tpu_custom_call.1} parent=11 // pred_check
          %p266 = pneg %p174
        $region26: #{tpu_custom_call.1} parent=11 // pred_check_branch
          %268 = sbr.rel (%p266) target = $region28
        $region27: #{tpu_custom_call.1} parent=11 // pred_region
          _
        $region28: #{tpu_custom_call.1} parent=11 // pred_fallthru
          _
        // Predicated region
        $region29: #{tpu_custom_call.1} parent=11 // pred_check
          %p269 = pneg %p195
        $region30: #{tpu_custom_call.1} parent=11 // pred_check_branch
          %271 = sbr.rel (%p269) target = $region32
        $region31: #{tpu_custom_call.1} parent=11 // pred_region
          _
        $region32: #{tpu_custom_call.1} parent=11 // pred_fallthru
          _
        // Predicated region
        $region33: #{tpu_custom_call.1} parent=11 // pred_check
          %p272 = pneg %p216
        $region34: #{tpu_custom_call.1} parent=11 // pred_check_branch
          %274 = sbr.rel (%p272) target = $region36
        $region35: #{tpu_custom_call.1} parent=11 // pred_region
          _
        $region36: #{tpu_custom_call.1} parent=11 // pred_fallthru
          _
      $region12: #{tpu_custom_call.1} parent=5 // pred_fallthru
        _
      %p275 = scmp.lt.s32.totalorder %s24, 4
      // Predicated region
      $region37: #{tpu_custom_call.1} parent=5 // pred_check
        %p276 = pneg %p275
      $region38: #{tpu_custom_call.1} parent=5 // pred_check_branch
        %278 = sbr.rel (%p276) target = $region40
      $region39: #{tpu_custom_call.1} parent=5 // pred_region
        // Predicated region
        $region41: #{tpu_custom_call.1} parent=39 // pred_check
          %p279 = pneg %p58
        $region42: #{tpu_custom_call.1} parent=39 // pred_check_branch
          %281 = sbr.rel (%p279) target = $region44
        $region43: #{tpu_custom_call.1} parent=39 // pred_region
          %s282 = smul.u32 16, %s32
          %p283 = scmp.lt.s32.totalorder %s31, 1
          %s284 = scalar_select %p283, %s31, 1
          %p285 = scmp.lt.s32.totalorder %s282, 31
          %s286 = scalar_select %p285, %s282, 31
          %s287 = smul.addr %s284, 32
          %s288 = sadd.s32 %s286, %s287
          %s289 = smul.addr %s288, 4
          %s290 = scalar_lea.vmem %s1, %s289
          %s291 = smul.u32 16, %s32
        $region44: #{tpu_custom_call.1} parent=39 // pred_fallthru
          _
        // Predicated region
        $region45: #{tpu_custom_call.1} parent=39 // pred_check
          %p292 = pneg %p84
        $region46: #{tpu_custom_call.1} parent=39 // pred_check_branch
          %294 = sbr.rel (%p292) target = $region48
        $region47: #{tpu_custom_call.1} parent=39 // pred_region
          %s295 = smul.u32 16, %s32
          %p296 = scmp.lt.s32.totalorder %s295, 31
          %s297 = scalar_select %p296, %s295, 31
          %s298 = smul.addr %s297, 2
          %s299 = smul.addr %s298, 4
          %s300 = scalar_lea.vmem %s2, %s299
          %s301 = smul.u32 16, %s32
        $region48: #{tpu_custom_call.1} parent=39 // pred_fallthru
          _
      $region40: #{tpu_custom_call.1} parent=5 // pred_fallthru
        _
      %p302 = scmp.le.s32.totalorder 1, %s24
      %p303 = scmp.lt.s32.totalorder %s24, 5
      %p304 = pnand %p302, %p303
      %p305 = pneg %p304
      // Predicated region
      $region49: #{tpu_custom_call.1} parent=5 // pred_check
        _
      $region50: #{tpu_custom_call.1} parent=5 // pred_check_branch
        %307 = sbr.rel (%p304) target = $region52
      $region51: #{tpu_custom_call.1} parent=5 // pred_region
        %s308 = ssub.s32 %s24, 1
        %s309 = smul.u32 16, %s34
        %p310 = scmp.lt.s32.totalorder %s33, 1
        %s311 = scalar_select %p310, %s33, 1
        %p312 = scmp.lt.s32.totalorder %s309, 31
        %s313 = scalar_select %p312, %s309, 31
        %s314 = smul.addr %s311, 32
        %s315 = sadd.s32 %s313, %s314
        %s316 = smul.addr %s315, 4
        %s317 = scalar_lea.vmem %s1, %s316
        %p318 = pneg %p64
        %p319 = pneg %p61
        %s320 = smul.u32 16, %s34
        %p321 = scmp.lt.s32.totalorder %s320, 31
        %s322 = scalar_select %p321, %s320, 31
        %s323 = smul.addr %s322, 2
        %s324 = smul.addr %s323, 4
        %s325 = scalar_lea.vmem %s2, %s324
        %p326 = pneg %p90
        %p327 = pneg %p87
        %p328 = pneg %p111
        %p329 = pneg %p108
        %p330 = pneg %p132
        %p331 = pneg %p129
        %p332 = pneg %p153
        %p333 = pneg %p150
        %p334 = pneg %p174
        %p335 = pneg %p171
        %p336 = pneg %p195
        %p337 = pneg %p192
        %p338 = pneg %p216
        %p339 = pneg %p213
        %p340 = pneg %p242
        %p341 = pneg %p239
        %s342 = sand.u32 %s229, 1
        %s343 = scalar_lea.sflag [#allocation6], %s342
        %s344 = sand.u32 %s229, 1
        %s345 = smul.addr %s344, 8
        %s346 = scalar_lea.vmem [#allocation5], %s345
        %s347 = smul.u32 16, %s34
        %p348 = scmp.lt.s32.totalorder %s33, 1
        %s349 = scalar_select %p348, %s33, 1
        %p350 = scmp.lt.s32.totalorder %s347, 31
        %s351 = scalar_select %p350, %s347, 31
        %s352 = smul.addr %s349, 32
        %s353 = sadd.s32 %s351, %s352
        %s354 = smul.addr %s353, 4
        %s355 = scalar_lea.vmem %s1, %s354
        %s356 = smul.u32 16, %s34
        %s357 = smul.u32 16, %s34
        %p358 = scmp.lt.s32.totalorder %s357, 31
        %s359 = scalar_select %p358, %s357, 31
        %s360 = smul.addr %s359, 2
        %s361 = smul.addr %s360, 4
        %s362 = scalar_lea.vmem %s2, %s361
        %s363 = smul.u32 16, %s34
        %p365 = scmp.eq.s32.totalorder %s34, 0
        // Predicated region
        $region53: #{tpu_custom_call.1} parent=51 // pred_check
          %p366 = pneg %p365
        $region54: #{tpu_custom_call.1} parent=51 // pred_check_branch
          %368 = sbr.rel (%p366) target = $region56
        $region55: #{tpu_custom_call.1} parent=51 // pred_region
          %vm369 = vcmask 130048
          %370 = vst.msk [vmem:[#allocation2] sm:$0xff] %vm369, 0.0
        $region56: #{tpu_custom_call.1} parent=51 // pred_fallthru
          _
        %v371 = vld [vmem:[%s355] sm:$0xf]
        %v372 = vld [vmem:[%s355 + $0x4] sm:$0xf]
        %v373 = vld [vmem:[%s355 + $0x8] sm:$0xf]
        %v374 = vld [vmem:[%s355 + $0xc] sm:$0xf]
        %v375 = vld [vmem:[%s355 + $0x10] sm:$0xf]
        %v376 = vld [vmem:[%s355 + $0x14] sm:$0xf]
        %v377 = vld [vmem:[%s355 + $0x18] sm:$0xf]
        %v378 = vld [vmem:[%s355 + $0x1c] sm:$0xf]
        %v379 = vld [vmem:[%s355 + $0x20] sm:$0xf]
        %v380 = vld [vmem:[%s355 + $0x24] sm:$0xf]
        %v381 = vld [vmem:[%s355 + $0x28] sm:$0xf]
        %v382 = vld [vmem:[%s355 + $0x2c] sm:$0xf]
        %v383 = vld [vmem:[%s355 + $0x30] sm:$0xf]
        %v384 = vld [vmem:[%s355 + $0x34] sm:$0xf]
        %v385 = vld [vmem:[%s355 + $0x38] sm:$0xf]
        %v386 = vld [vmem:[%s355 + $0x3c] sm:$0xf]
        %v387 = vld [vmem:[%s3] sm:$0xff]
        %v388 = vld [vmem:[%s3 + $0x8] sm:$0xff]
        %v389 = vld [vmem:[%s3 + $0x10] sm:$0xff]
        %v390 = vld [vmem:[%s3 + $0x18] sm:$0xff]
        %v391 = vld [vmem:[%s3 + $0x20] sm:$0xff]
        %v392 = vld [vmem:[%s3 + $0x28] sm:$0xff]
        %v393 = vld [vmem:[%s3 + $0x30] sm:$0xff]
        %v394 = vld [vmem:[%s3 + $0x38] sm:$0xff]
        %v395 = vld [vmem:[%s3 + $0x40] sm:$0xff]
        %v396 = vld [vmem:[%s3 + $0x48] sm:$0xff]
        %v397 = vld [vmem:[%s3 + $0x50] sm:$0xff]
        %v398 = vld [vmem:[%s3 + $0x58] sm:$0xff]
        %v399 = vld [vmem:[%s3 + $0x60] sm:$0x33]
        %v400 = vld [vmem:[%s4] sm:$0x3]
        %v402 = vlaneseq
        %v403 = vshrl.u32 %v402, 7
        %v404 = vsub.s32 0, %v403
        %v405 = vrot.slane %v400, %v404
        %v406 = vlaneseq
        %v407 = vshrl.u32 %v406, 7
        %v408 = vsub.s32 1, %v407
        %v409 = vrot.slane %v400, %v408
        %v428 = vunpack.c.l.b16 %v371
        %v429 = vunpack.c.l.b16 %v372
        %v430 = vunpack.c.l.b16 %v373
        %v431 = vunpack.c.l.b16 %v374
        %v432 = vunpack.c.l.b16 %v375
        %v433 = vunpack.c.l.b16 %v376
        %v434 = vunpack.c.l.b16 %v377
        %v435 = vunpack.c.l.b16 %v378
        %v436 = vunpack.c.l.b16 %v379
        %v437 = vunpack.c.l.b16 %v380
        %v438 = vunpack.c.l.b16 %v381
        %v439 = vunpack.c.l.b16 %v382
        %v440 = vunpack.c.l.b16 %v383
        %v441 = vunpack.c.l.b16 %v384
        %v442 = vunpack.c.l.b16 %v385
        %v443 = vunpack.c.l.b16 %v386
        %v444 = vpack.c.b16 %v429, %v428
        %v445 = vpack.c.b16 %v431, %v430
        %v446 = vpack.c.b16 %v433, %v432
        %v447 = vpack.c.b16 %v435, %v434
        %v448 = vpack.c.b16 %v437, %v436
        %v449 = vpack.c.b16 %v439, %v438
        %v450 = vpack.c.b16 %v441, %v440
        %v451 = vpack.c.b16 %v443, %v442
        %v465 = vunpack.c.l.b16 %v387
        %v466 = vunpack.c.h.b16 %v387
        %v467 = vunpack.c.l.b16 %v388
        %v468 = vunpack.c.h.b16 %v388
        %v469 = vunpack.c.l.b16 %v389
        %v470 = vunpack.c.h.b16 %v389
        %v471 = vunpack.c.l.b16 %v390
        %v472 = vunpack.c.h.b16 %v390
        %v473 = vunpack.c.l.b16 %v391
        %v474 = vunpack.c.h.b16 %v391
        %v475 = vunpack.c.l.b16 %v392
        %v476 = vunpack.c.h.b16 %v392
        %v477 = vunpack.c.l.b16 %v393
        %v478 = vunpack.c.h.b16 %v393
        %v479 = vunpack.c.l.b16 %v394
        %v480 = vunpack.c.h.b16 %v394
        %v481 = vunpack.c.l.b16 %v395
        %v482 = vunpack.c.h.b16 %v395
        %v483 = vunpack.c.l.b16 %v396
        %v484 = vunpack.c.h.b16 %v396
        %v485 = vunpack.c.l.b16 %v397
        %v486 = vunpack.c.h.b16 %v397
        %v487 = vunpack.c.l.b16 %v398
        %v488 = vunpack.c.h.b16 %v398
        %v489 = vunpack.c.l.b16 %v399
        %v490 = vunpack.c.h.b16 %v399
        %v491 = vpack.c.b16 %v467, %v465
        %v492 = vpack.c.b16 %v468, %v466
        %v493 = vpack.c.b16 %v471, %v469
        %v494 = vpack.c.b16 %v472, %v470
        %v495 = vpack.c.b16 %v475, %v473
        %v496 = vpack.c.b16 %v476, %v474
        %v497 = vpack.c.b16 %v479, %v477
        %v498 = vpack.c.b16 %v480, %v478
        %v499 = vpack.c.b16 %v483, %v481
        %v500 = vpack.c.b16 %v484, %v482
        %v501 = vpack.c.b16 %v487, %v485
        %v502 = vpack.c.b16 %v488, %v486
        %v503 = vpack.c.b16 %v489, %v489
        %v504 = vpack.c.b16 %v490, %v490
        %vm517 = vcmask 818176
        %v519 = vsel %vm517, %v444, 0
        %v522 = vsel %vm517, %v445, 0
        %v525 = vsel %vm517, %v446, 0
        %v528 = vsel %vm517, %v447, 0
        %v531 = vsel %vm517, %v448, 0
        %v534 = vsel %vm517, %v449, 0
        %v537 = vsel %vm517, %v450, 0
        %v540 = vsel %vm517, %v451, 0
        %vm542 = vcmask 1041408
        %v544 = vsel %vm542, %v503, 0
        %v547 = vsel %vm542, %v504, 0
        %549 = vmatprep.subr.bf16.mxu0 %v492
        %550 = vmatpush1.bf16.msra.mxu0 %v491
        %551 = vmatprep.subr.bf16.mxu0 %v494
        %552 = vmatpush1.bf16.msra.mxu0 %v493
        %553 = vmatprep.subr.bf16.mxu0 %v496
        %554 = vmatpush1.bf16.msra.mxu0 %v495
        %555 = vmatprep.subr.bf16.mxu0 %v498
        %556 = vmatpush1.bf16.msra.mxu0 %v497
        %557 = vmatprep.subr.bf16.mxu0 %v500
        %558 = vmatpush1.bf16.msra.mxu0 %v499
        %559 = vmatprep.subr.bf16.mxu0 %v502
        %560 = vmatpush1.bf16.msra.mxu0 %v501
        %561 = vmatprep.subr.bf16.mxu0 %v547
        %562 = vmatpush1.bf16.msra.mxu0 %v544
        %563 = vmatprep.subr.bf16.mxu0 0
        %564 = vmatpush1.bf16.msra.mxu0 0
        %565 = vmatprep.subr.bf16.mxu0 0
        %566 = vmatpush1.bf16.msra.mxu0 0
        %567 = vmatprep.subr.bf16.mxu0 0
        %568 = vmatpush1.bf16.msra.mxu0 0
        %569 = vmatprep.subr.bf16.mxu0 0
        %570 = vmatpush1.bf16.msra.mxu0 0
        %571 = vmatprep.subr.bf16.mxu0 0
        %572 = vmatpush1.bf16.msra.mxu0 0
        %573 = vmatprep.subr.bf16.mxu0 0
        %574 = vmatpush1.bf16.msra.mxu0 0
        %575 = vmatprep.subr.bf16.mxu0 0
        %576 = vmatpush1.bf16.msra.mxu0 0
        %577 = vmatprep.subr.bf16.mxu0 0
        %578 = vmatpush1.bf16.msra.mxu0 0
        %579 = vmatprep.subr.bf16.mxu0 0
        %580 = vmatpush1.bf16.msra.mxu0 0
        %581 = vmatprep.mubr.bf16.mxu0 0
        %582 = vmatmul.mubr.bf16.gmra.mrb[0].mxu0 %v519
        %v583 = vpop.f32.mrb[0].mxu0
        %v584 = vadd.f32 %v405, %v583
        %v585 = vpop.f32.mrb[0].mxu0
        %v586 = vadd.f32 %v409, %v585
        %v587 = vpop.f32.mrb[0].mxu0
        %v588 = vadd.f32 %v405, %v587
        %v589 = vpop.f32.mrb[0].mxu0
        %v590 = vadd.f32 %v409, %v589
        %591 = vmatprep.mubr.bf16.mxu0 0
        %592 = vmatmul.mubr.bf16.gmra.mrb[0].mxu0 %v522
        %v593 = vpop.f32.mrb[0].mxu0
        %v594 = vadd.f32 %v405, %v593
        %v595 = vpop.f32.mrb[0].mxu0
        %v596 = vadd.f32 %v409, %v595
        %v597 = vpop.f32.mrb[0].mxu0
        %v598 = vadd.f32 %v405, %v597
        %v599 = vpop.f32.mrb[0].mxu0
        %v600 = vadd.f32 %v409, %v599
        %601 = vmatprep.mubr.bf16.mxu0 0
        %602 = vmatmul.mubr.bf16.gmra.mrb[0].mxu0 %v525
        %v603 = vpop.f32.mrb[0].mxu0
        %v604 = vadd.f32 %v405, %v603
        %v605 = vpop.f32.mrb[0].mxu0
        %v606 = vadd.f32 %v409, %v605
        %v607 = vpop.f32.mrb[0].mxu0
        %v608 = vadd.f32 %v405, %v607
        %v609 = vpop.f32.mrb[0].mxu0
        %v610 = vadd.f32 %v409, %v609
        %611 = vmatprep.mubr.bf16.mxu0 0
        %612 = vmatmul.mubr.bf16.gmra.mrb[0].mxu0 %v528
        %v613 = vpop.f32.mrb[0].mxu0
        %v614 = vadd.f32 %v405, %v613
        %v615 = vpop.f32.mrb[0].mxu0
        %v616 = vadd.f32 %v409, %v615
        %v617 = vpop.f32.mrb[0].mxu0
        %v618 = vadd.f32 %v405, %v617
        %v619 = vpop.f32.mrb[0].mxu0
        %v620 = vadd.f32 %v409, %v619
        %621 = vmatprep.mubr.bf16.mxu0 0
        %622 = vmatmul.mubr.bf16.gmra.mrb[0].mxu0 %v531
        %v623 = vpop.f32.mrb[0].mxu0
        %v624 = vadd.f32 %v405, %v623
        %v625 = vpop.f32.mrb[0].mxu0
        %v626 = vadd.f32 %v409, %v625
        %v627 = vpop.f32.mrb[0].mxu0
        %v628 = vadd.f32 %v405, %v627
        %v629 = vpop.f32.mrb[0].mxu0
        %v630 = vadd.f32 %v409, %v629
        %631 = vmatprep.mubr.bf16.mxu0 0
        %632 = vmatmul.mubr.bf16.gmra.mrb[0].mxu0 %v534
        %v633 = vpop.f32.mrb[0].mxu0
        %v634 = vadd.f32 %v405, %v633
        %v635 = vpop.f32.mrb[0].mxu0
        %v636 = vadd.f32 %v409, %v635
        %v637 = vpop.f32.mrb[0].mxu0
        %v638 = vadd.f32 %v405, %v637
        %v639 = vpop.f32.mrb[0].mxu0
        %v640 = vadd.f32 %v409, %v639
        %641 = vmatprep.mubr.bf16.mxu0 0
        %642 = vmatmul.mubr.bf16.gmra.mrb[0].mxu0 %v537
        %v643 = vpop.f32.mrb[0].mxu0
        %v644 = vadd.f32 %v405, %v643
        %v645 = vpop.f32.mrb[0].mxu0
        %v646 = vadd.f32 %v409, %v645
        %v647 = vpop.f32.mrb[0].mxu0
        %v648 = vadd.f32 %v405, %v647
        %v649 = vpop.f32.mrb[0].mxu0
        %v650 = vadd.f32 %v409, %v649
        %651 = vmatprep.mubr.bf16.mxu0 0
        %652 = vmatmul.mubr.bf16.gmra.mrb[0].mxu0 %v540
        %v653 = vpop.f32.mrb[0].mxu0
        %v654 = vadd.f32 %v405, %v653
        %v655 = vpop.f32.mrb[0].mxu0
        %v656 = vadd.f32 %v409, %v655
        %v657 = vpop.f32.mrb[0].mxu0
        %v658 = vadd.f32 %v405, %v657
        %v659 = vpop.f32.mrb[0].mxu0
        %v660 = vadd.f32 %v409, %v659
        %661 = vdwg.mxu0
        %v662 = vmax.f32 %v584, 0.0
        %v663 = vmax.f32 %v586, 0.0
        %v664 = vmax.f32 %v588, 0.0
        %v665 = vmax.f32 %v590, 0.0
        %v666 = vmax.f32 %v594, 0.0
        %v667 = vmax.f32 %v596, 0.0
        %v668 = vmax.f32 %v598, 0.0
        %v669 = vmax.f32 %v600, 0.0
        %v670 = vmax.f32 %v604, 0.0
        %v671 = vmax.f32 %v606, 0.0
        %v672 = vmax.f32 %v608, 0.0
        %v673 = vmax.f32 %v610, 0.0
        %v674 = vmax.f32 %v614, 0.0
        %v675 = vmax.f32 %v616, 0.0
        %v676 = vmax.f32 %v618, 0.0
        %v677 = vmax.f32 %v620, 0.0
        %v678 = vmax.f32 %v624, 0.0
        %v679 = vmax.f32 %v626, 0.0
        %v680 = vmax.f32 %v628, 0.0
        %v681 = vmax.f32 %v630, 0.0
        %v682 = vmax.f32 %v634, 0.0
        %v683 = vmax.f32 %v636, 0.0
        %v684 = vmax.f32 %v638, 0.0
        %v685 = vmax.f32 %v640, 0.0
        %v686 = vmax.f32 %v644, 0.0
        %v687 = vmax.f32 %v646, 0.0
        %v688 = vmax.f32 %v648, 0.0
        %v689 = vmax.f32 %v650, 0.0
        %v690 = vmax.f32 %v654, 0.0
        %v691 = vmax.f32 %v656, 0.0
        %v692 = vmax.f32 %v658, 0.0
        %v693 = vmax.f32 %v660, 0.0
        %v694 = vld [vmem:[%s362] sm:$0xff]
        %v695 = vld [vmem:[%s362 + $0x8] sm:$0xff]
        %v696 = vld [vmem:[%s362 + $0x10] sm:$0xff]
        %v697 = vld [vmem:[%s362 + $0x18] sm:$0xff]
        %v698 = vld [vmem:[%s362 + $0x20] sm:$0xff]
        %v699 = vld [vmem:[%s362 + $0x28] sm:$0xff]
        %v700 = vld [vmem:[%s362 + $0x30] sm:$0xff]
        %v701 = vld [vmem:[%s362 + $0x38] sm:$0xff]
        %v702 = vld [vmem:[%s362 + $0x40] sm:$0xff]
        %v703 = vld [vmem:[%s362 + $0x48] sm:$0xff]
        %v704 = vld [vmem:[%s362 + $0x50] sm:$0xff]
        %v705 = vld [vmem:[%s362 + $0x58] sm:$0xff]
        %v706 = vld [vmem:[%s362 + $0x60] sm:$0xff]
        %v707 = vld [vmem:[%s362 + $0x68] sm:$0xff]
        %v708 = vld [vmem:[%s362 + $0x70] sm:$0xff]
        %v709 = vld [vmem:[%s362 + $0x78] sm:$0xff]
        %v710 = vunpack.c.l.bf16 %v694
        %v711 = vunpack.c.h.bf16 %v694
        %v712 = vunpack.c.l.bf16 %v695
        %v713 = vunpack.c.h.bf16 %v695
        %v714 = vunpack.c.l.bf16 %v696
        %v715 = vunpack.c.h.bf16 %v696
        %v716 = vunpack.c.l.bf16 %v697
        %v717 = vunpack.c.h.bf16 %v697
        %v718 = vunpack.c.l.bf16 %v698
        %v719 = vunpack.c.h.bf16 %v698
        %v720 = vunpack.c.l.bf16 %v699
        %v721 = vunpack.c.h.bf16 %v699
        %v722 = vunpack.c.l.bf16 %v700
        %v723 = vunpack.c.h.bf16 %v700
        %v724 = vunpack.c.l.bf16 %v701
        %v725 = vunpack.c.h.bf16 %v701
        %v726 = vunpack.c.l.bf16 %v702
        %v727 = vunpack.c.h.bf16 %v702
        %v728 = vunpack.c.l.bf16 %v703
        %v729 = vunpack.c.h.bf16 %v703
        %v730 = vunpack.c.l.bf16 %v704
        %v731 = vunpack.c.h.bf16 %v704
        %v732 = vunpack.c.l.bf16 %v705
        %v733 = vunpack.c.h.bf16 %v705
        %v734 = vunpack.c.l.bf16 %v706
        %v735 = vunpack.c.h.bf16 %v706
        %v736 = vunpack.c.l.bf16 %v707
        %v737 = vunpack.c.h.bf16 %v707
        %v738 = vunpack.c.l.bf16 %v708
        %v739 = vunpack.c.h.bf16 %v708
        %v740 = vunpack.c.l.bf16 %v709
        %v741 = vunpack.c.h.bf16 %v709
        %v742 = vmul.f32 %v662, %v710
        %v743 = vmul.f32 %v663, %v711
        %v744 = vmul.f32 %v664, %v712
        %v745 = vmul.f32 %v665, %v713
        %v746 = vmul.f32 %v666, %v714
        %v747 = vmul.f32 %v667, %v715
        %v748 = vmul.f32 %v668, %v716
        %v749 = vmul.f32 %v669, %v717
        %v750 = vmul.f32 %v670, %v718
        %v751 = vmul.f32 %v671, %v719
        %v752 = vmul.f32 %v672, %v720
        %v753 = vmul.f32 %v673, %v721
        %v754 = vmul.f32 %v674, %v722
        %v755 = vmul.f32 %v675, %v723
        %v756 = vmul.f32 %v676, %v724
        %v757 = vmul.f32 %v677, %v725
        %v758 = vmul.f32 %v678, %v726
        %v759 = vmul.f32 %v679, %v727
        %v760 = vmul.f32 %v680, %v728
        %v761 = vmul.f32 %v681, %v729
        %v762 = vmul.f32 %v682, %v730
        %v763 = vmul.f32 %v683, %v731
        %v764 = vmul.f32 %v684, %v732
        %v765 = vmul.f32 %v685, %v733
        %v766 = vmul.f32 %v686, %v734
        %v767 = vmul.f32 %v687, %v735
        %v768 = vmul.f32 %v688, %v736
        %v769 = vmul.f32 %v689, %v737
        %v770 = vmul.f32 %v690, %v738
        %v771 = vmul.f32 %v691, %v739
        %v772 = vmul.f32 %v692, %v740
        %v773 = vmul.f32 %v693, %v741
        %v774 = vpack.c.bf16 %v744, %v742
        %v775 = vpack.c.bf16 %v745, %v743
        %v776 = vpack.c.bf16 %v748, %v746
        %v777 = vpack.c.bf16 %v749, %v747
        %v778 = vpack.c.bf16 %v752, %v750
        %v779 = vpack.c.bf16 %v753, %v751
        %v780 = vpack.c.bf16 %v756, %v754
        %v781 = vpack.c.bf16 %v757, %v755
        %v782 = vpack.c.bf16 %v760, %v758
        %v783 = vpack.c.bf16 %v761, %v759
        %v784 = vpack.c.bf16 %v764, %v762
        %v785 = vpack.c.bf16 %v765, %v763
        %v786 = vpack.c.bf16 %v768, %v766
        %v787 = vpack.c.bf16 %v769, %v767
        %v788 = vpack.c.bf16 %v772, %v770
        %v789 = vpack.c.bf16 %v773, %v771
        %v790 = vld [vmem:[%s5] sm:$0xf]
        %v791 = vld [vmem:[%s5 + $0x4] sm:$0xf]
        %v792 = vld [vmem:[%s5 + $0x8] sm:$0xf]
        %v793 = vld [vmem:[%s5 + $0xc] sm:$0xf]
        %v794 = vld [vmem:[%s5 + $0x10] sm:$0xf]
        %v795 = vld [vmem:[%s5 + $0x14] sm:$0xf]
        %v796 = vld [vmem:[%s5 + $0x18] sm:$0xf]
        %v797 = vld [vmem:[%s5 + $0x1c] sm:$0xf]
        %v798 = vld [vmem:[%s5 + $0x20] sm:$0xf]
        %v799 = vld [vmem:[%s5 + $0x24] sm:$0xf]
        %v800 = vld [vmem:[%s5 + $0x28] sm:$0xf]
        %v801 = vld [vmem:[%s5 + $0x2c] sm:$0xf]
        %v802 = vld [vmem:[%s5 + $0x30] sm:$0xf]
        %v803 = vld [vmem:[%s5 + $0x34] sm:$0xf]
        %v804 = vld [vmem:[%s5 + $0x38] sm:$0xf]
        %v805 = vld [vmem:[%s5 + $0x3c] sm:$0xf]
        %v806 = vld [vmem:[%s5 + $0x40] sm:$0xf]
        %v807 = vld [vmem:[%s5 + $0x44] sm:$0xf]
        %v808 = vld [vmem:[%s6] sm:$0x1]
        %v810 = vlaneseq
        %v811 = vshrl.u32 %v810, 7
        %v812 = vsub.s32 0, %v811
        %v813 = vrot.slane %v808, %v812
        %v833 = vunpack.c.l.b16 %v790
        %v834 = vunpack.c.l.b16 %v791
        %v835 = vunpack.c.l.b16 %v792
        %v836 = vunpack.c.l.b16 %v793
        %v837 = vunpack.c.l.b16 %v794
        %v838 = vunpack.c.l.b16 %v795
        %v839 = vunpack.c.l.b16 %v796
        %v840 = vunpack.c.l.b16 %v797
        %v841 = vunpack.c.l.b16 %v798
        %v842 = vunpack.c.l.b16 %v799
        %v843 = vunpack.c.l.b16 %v800
        %v844 = vunpack.c.l.b16 %v801
        %v845 = vunpack.c.l.b16 %v802
        %v846 = vunpack.c.l.b16 %v803
        %v847 = vunpack.c.l.b16 %v804
        %v848 = vunpack.c.l.b16 %v805
        %v849 = vunpack.c.l.b16 %v806
        %v850 = vunpack.c.l.b16 %v807
        %v851 = vpack.c.b16 %v834, %v833
        %v852 = vpack.c.b16 %v836, %v835
        %v853 = vpack.c.b16 %v838, %v837
        %v854 = vpack.c.b16 %v840, %v839
        %v855 = vpack.c.b16 %v842, %v841
        %v856 = vpack.c.b16 %v844, %v843
        %v857 = vpack.c.b16 %v846, %v845
        %v858 = vpack.c.b16 %v848, %v847
        %v859 = vpack.c.b16 %v850, %v849
        %vm869 = vcmask 130048
        %v871 = vsel %vm869, %v775, 0
        %v874 = vsel %vm869, %v777, 0
        %v877 = vsel %vm869, %v779, 0
        %v880 = vsel %vm869, %v781, 0
        %v883 = vsel %vm869, %v783, 0
        %v886 = vsel %vm869, %v785, 0
        %v889 = vsel %vm869, %v787, 0
        %v892 = vsel %vm869, %v789, 0
        %894 = vmatprep.subr.bf16.mxu0 0
        %895 = vmatpush1.bf16.msra.mxu0 %v851
        %896 = vmatprep.subr.bf16.mxu0 0
        %897 = vmatpush1.bf16.msra.mxu0 %v852
        %898 = vmatprep.subr.bf16.mxu0 0
        %899 = vmatpush1.bf16.msra.mxu0 %v853
        %900 = vmatprep.subr.bf16.mxu0 0
        %901 = vmatpush1.bf16.msra.mxu0 %v854
        %902 = vmatprep.subr.bf16.mxu0 0
        %903 = vmatpush1.bf16.msra.mxu0 %v855
        %904 = vmatprep.subr.bf16.mxu0 0
        %905 = vmatpush1.bf16.msra.mxu0 %v856
        %906 = vmatprep.subr.bf16.mxu0 0
        %907 = vmatpush1.bf16.msra.mxu0 %v857
        %908 = vmatprep.subr.bf16.mxu0 0
        %909 = vmatpush1.bf16.msra.mxu0 %v858
        %910 = vmatprep.subr.bf16.mxu0 0
        %911 = vmatpush1.bf16.msra.mxu0 %v859
        %912 = vmatprep.subr.bf16.mxu0 0
        %913 = vmatpush1.bf16.msra.mxu0 0
        %914 = vmatprep.subr.bf16.mxu0 0
        %915 = vmatpush1.bf16.msra.mxu0 0
        %916 = vmatprep.subr.bf16.mxu0 0
        %917 = vmatpush1.bf16.msra.mxu0 0
        %918 = vmatprep.subr.bf16.mxu0 0
        %919 = vmatpush1.bf16.msra.mxu0 0
        %920 = vmatprep.subr.bf16.mxu0 0
        %921 = vmatpush1.bf16.msra.mxu0 0
        %922 = vmatprep.subr.bf16.mxu0 0
        %923 = vmatpush1.bf16.msra.mxu0 0
        %924 = vmatprep.subr.bf16.mxu0 0
        %925 = vmatpush1.bf16.msra.mxu0 0
        %926 = vmatprep.mubr.bf16.mxu0 %v871
        %927 = vmatmul.mubr.bf16.gmra.mrb[0].mxu0 %v774
        %v928 = vpop.f32.mrb[0].mxu0
        %v929 = vadd.f32 %v813, %v928
        %v930 = vpop.f32.mrb[0].mxu0
        %v931 = vpop.f32.mrb[0].mxu0
        %v932 = vadd.f32 %v813, %v931
        %v933 = vpop.f32.mrb[0].mxu0
        %934 = vmatprep.mubr.bf16.mxu0 %v874
        %935 = vmatmul.mubr.bf16.gmra.mrb[0].mxu0 %v776
        %v936 = vpop.f32.mrb[0].mxu0
        %v937 = vadd.f32 %v813, %v936
        %v938 = vpop.f32.mrb[0].mxu0
        %v939 = vpop.f32.mrb[0].mxu0
        %v940 = vadd.f32 %v813, %v939
        %v941 = vpop.f32.mrb[0].mxu0
        %942 = vmatprep.mubr.bf16.mxu0 %v877
        %943 = vmatmul.mubr.bf16.gmra.mrb[0].mxu0 %v778
        %v944 = vpop.f32.mrb[0].mxu0
        %v945 = vadd.f32 %v813, %v944
        %v946 = vpop.f32.mrb[0].mxu0
        %v947 = vpop.f32.mrb[0].mxu0
        %v948 = vadd.f32 %v813, %v947
        %v949 = vpop.f32.mrb[0].mxu0
        %950 = vmatprep.mubr.bf16.mxu0 %v880
        %951 = vmatmul.mubr.bf16.gmra.mrb[0].mxu0 %v780
        %v952 = vpop.f32.mrb[0].mxu0
        %v953 = vadd.f32 %v813, %v952
        %v954 = vpop.f32.mrb[0].mxu0
        %v955 = vpop.f32.mrb[0].mxu0
        %v956 = vadd.f32 %v813, %v955
        %v957 = vpop.f32.mrb[0].mxu0
        %958 = vmatprep.mubr.bf16.mxu0 %v883
        %959 = vmatmul.mubr.bf16.gmra.mrb[0].mxu0 %v782
        %v960 = vpop.f32.mrb[0].mxu0
        %v961 = vadd.f32 %v813, %v960
        %v962 = vpop.f32.mrb[0].mxu0
        %v963 = vpop.f32.mrb[0].mxu0
        %v964 = vadd.f32 %v813, %v963
        %v965 = vpop.f32.mrb[0].mxu0
        %966 = vmatprep.mubr.bf16.mxu0 %v886
        %967 = vmatmul.mubr.bf16.gmra.mrb[0].mxu0 %v784
        %v968 = vpop.f32.mrb[0].mxu0
        %v969 = vadd.f32 %v813, %v968
        %v970 = vpop.f32.mrb[0].mxu0
        %v971 = vpop.f32.mrb[0].mxu0
        %v972 = vadd.f32 %v813, %v971
        %v973 = vpop.f32.mrb[0].mxu0
        %974 = vmatprep.mubr.bf16.mxu0 %v889
        %975 = vmatmul.mubr.bf16.gmra.mrb[0].mxu0 %v786
        %v976 = vpop.f32.mrb[0].mxu0
        %v977 = vadd.f32 %v813, %v976
        %v978 = vpop.f32.mrb[0].mxu0
        %v979 = vpop.f32.mrb[0].mxu0
        %v980 = vadd.f32 %v813, %v979
        %v981 = vpop.f32.mrb[0].mxu0
        %982 = vmatprep.mubr.bf16.mxu0 %v892
        %983 = vmatmul.mubr.bf16.gmra.mrb[0].mxu0 %v788
        %v984 = vpop.f32.mrb[0].mxu0
        %v985 = vadd.f32 %v813, %v984
        %v986 = vpop.f32.mrb[0].mxu0
        %v987 = vpop.f32.mrb[0].mxu0
        %v988 = vadd.f32 %v813, %v987
        %v989 = vpop.f32.mrb[0].mxu0
        %990 = vdwg.mxu0
        %v991 = vmax.f32 %v929, 0.0
        %v992 = vmax.f32 %v932, 0.0
        %v993 = vmax.f32 %v937, 0.0
        %v994 = vmax.f32 %v940, 0.0
        %v995 = vmax.f32 %v945, 0.0
        %v996 = vmax.f32 %v948, 0.0
        %v997 = vmax.f32 %v953, 0.0
        %v998 = vmax.f32 %v956, 0.0
        %v999 = vmax.f32 %v961, 0.0
        %v1000 = vmax.f32 %v964, 0.0
        %v1001 = vmax.f32 %v969, 0.0
        %v1002 = vmax.f32 %v972, 0.0
        %v1003 = vmax.f32 %v977, 0.0
        %v1004 = vmax.f32 %v980, 0.0
        %v1005 = vmax.f32 %v985, 0.0
        %v1006 = vmax.f32 %v988, 0.0
        %v1007 = vlaneseq
        %v1008 = vshrl.u32 %v1007, 7
        %v1009 = vlaneseq
        %v1010 = vand.u32 %v1009, 127
        %s1011 = smul.u32 %s34, 128
        %v1012 = vstv %s1011
        %v1013 = vadd.s32 %v1010, %v1012
        %s1014 = smul.u32 %s33, 128
        %s1015 = sld [smem:[#allocation4 + %s1014]]
        %p1016 = scmp.gt.s32.totalorder %s1015, 0
        %s1017 = scalar_select %p1016, %s1015, 0
        %p1018 = scmp.lt.s32.totalorder %s1017, 255
        %s1019 = scalar_select %p1018, %s1017, 255
        %vm1020 = vcmp.eq.s32.totalorder %v1008, 0
        %v1021 = vstv %s1019
        %vm1022 = vcmp.eq.s32.totalorder %v1013, %v1021
        %vm1023 = vmand %vm1020, %vm1022
        %v1024 = vsel %vm1023, 1.0, 0.0
        %s1025 = sadd.s32 %s1014, 1
        %s1026 = sld [smem:[#allocation4 + %s1025]]
        %p1027 = scmp.gt.s32.totalorder %s1026, 0
        %s1028 = scalar_select %p1027, %s1026, 0
        %p1029 = scmp.lt.s32.totalorder %s1028, 255
        %s1030 = scalar_select %p1029, %s1028, 255
        %vm1031 = vcmp.eq.s32.totalorder %v1008, 1
        %v1032 = vstv %s1030
        %vm1033 = vcmp.eq.s32.totalorder %v1013, %v1032
        %vm1034 = vmand %vm1031, %vm1033
        %v1035 = vsel %vm1034, 1.0, %v1024
        %s1036 = sadd.s32 %s1014, 2
        %s1037 = sld [smem:[#allocation4 + %s1036]]
        %p1038 = scmp.gt.s32.totalorder %s1037, 0
        %s1039 = scalar_select %p1038, %s1037, 0
        %p1040 = scmp.lt.s32.totalorder %s1039, 255
        %s1041 = scalar_select %p1040, %s1039, 255
        %vm1042 = vcmp.eq.s32.totalorder %v1008, 2
        %v1043 = vstv %s1041
        %vm1044 = vcmp.eq.s32.totalorder %v1013, %v1043
        %vm1045 = vmand %vm1042, %vm1044
        %v1046 = vsel %vm1045, 1.0, %v1035
        %s1047 = sadd.s32 %s1014, 3
        %s1048 = sld [smem:[#allocation4 + %s1047]]
        %p1049 = scmp.gt.s32.totalorder %s1048, 0
        %s1050 = scalar_select %p1049, %s1048, 0
        %p1051 = scmp.lt.s32.totalorder %s1050, 255
        %s1052 = scalar_select %p1051, %s1050, 255
        %vm1053 = vcmp.eq.s32.totalorder %v1008, 3
        %v1054 = vstv %s1052
        %vm1055 = vcmp.eq.s32.totalorder %v1013, %v1054
        %vm1056 = vmand %vm1053, %vm1055
        %v1057 = vsel %vm1056, 1.0, %v1046
        %s1058 = sadd.s32 %s1014, 4
        %s1059 = sld [smem:[#allocation4 + %s1058]]
        %p1060 = scmp.gt.s32.totalorder %s1059, 0
        %s1061 = scalar_select %p1060, %s1059, 0
        %p1062 = scmp.lt.s32.totalorder %s1061, 255
        %s1063 = scalar_select %p1062, %s1061, 255
        %vm1064 = vcmp.eq.s32.totalorder %v1008, 4
        %v1065 = vstv %s1063
        %vm1066 = vcmp.eq.s32.totalorder %v1013, %v1065
        %vm1067 = vmand %vm1064, %vm1066
        %v1068 = vsel %vm1067, 1.0, %v1057
        %s1069 = sadd.s32 %s1014, 5
        %s1070 = sld [smem:[#allocation4 + %s1069]]
        %p1071 = scmp.gt.s32.totalorder %s1070, 0
        %s1072 = scalar_select %p1071, %s1070, 0
        %p1073 = scmp.lt.s32.totalorder %s1072, 255
        %s1074 = scalar_select %p1073, %s1072, 255
        %vm1075 = vcmp.eq.s32.totalorder %v1008, 5
        %v1076 = vstv %s1074
        %vm1077 = vcmp.eq.s32.totalorder %v1013, %v1076
        %vm1078 = vmand %vm1075, %vm1077
        %v1079 = vsel %vm1078, 1.0, %v1068
        %s1080 = sadd.s32 %s1014, 6
        %s1081 = sld [smem:[#allocation4 + %s1080]]
        %p1082 = scmp.gt.s32.totalorder %s1081, 0
        %s1083 = scalar_select %p1082, %s1081, 0
        %p1084 = scmp.lt.s32.totalorder %s1083, 255
        %s1085 = scalar_select %p1084, %s1083, 255
        %vm1086 = vcmp.eq.s32.totalorder %v1008, 6
        %v1087 = vstv %s1085
        %vm1088 = vcmp.eq.s32.totalorder %v1013, %v1087
        %vm1089 = vmand %vm1086, %vm1088
        %v1090 = vsel %vm1089, 1.0, %v1079
        %s1091 = sadd.s32 %s1014, 7
        %s1092 = sld [smem:[#allocation4 + %s1091]]
        %p1093 = scmp.gt.s32.totalorder %s1092, 0
        %s1094 = scalar_select %p1093, %s1092, 0
        %p1095 = scmp.lt.s32.totalorder %s1094, 255
        %s1096 = scalar_select %p1095, %s1094, 255
        %vm1097 = vcmp.eq.s32.totalorder %v1008, 7
        %v1098 = vstv %s1096
        %vm1099 = vcmp.eq.s32.totalorder %v1013, %v1098
        %vm1100 = vmand %vm1097, %vm1099
        %v1101 = vsel %vm1100, 1.0, %v1090
        %v1102 = vld [vmem:[#allocation2] sm:$0xff]
        %v1103 = vpack.c.bf16 %v1101, %v1101
        %v1104 = vpack.c.bf16 %v992, %v991
        %v1105 = vpack.c.bf16 %v994, %v993
        %v1106 = vpack.c.bf16 %v996, %v995
        %v1107 = vpack.c.bf16 %v998, %v997
        %v1108 = vpack.c.bf16 %v1000, %v999
        %v1109 = vpack.c.bf16 %v1002, %v1001
        %v1110 = vpack.c.bf16 %v1004, %v1003
        %v1111 = vpack.c.bf16 %v1006, %v1005
        %1112 = vmatprep.subr.bf16.mxu0 0
        %1113 = vmatpush1.bf16.msra.mxu0 %v1104
        %1114 = vmatprep.subr.bf16.mxu0 0
        %1115 = vmatpush1.bf16.msra.mxu0 %v1105
        %1116 = vmatprep.subr.bf16.mxu0 0
        %1117 = vmatpush1.bf16.msra.mxu0 %v1106
        %1118 = vmatprep.subr.bf16.mxu0 0
        %1119 = vmatpush1.bf16.msra.mxu0 %v1107
        %1120 = vmatprep.subr.bf16.mxu0 0
        %1121 = vmatpush1.bf16.msra.mxu0 %v1108
        %1122 = vmatprep.subr.bf16.mxu0 0
        %1123 = vmatpush1.bf16.msra.mxu0 %v1109
        %1124 = vmatprep.subr.bf16.mxu0 0
        %1125 = vmatpush1.bf16.msra.mxu0 %v1110
        %1126 = vmatprep.subr.bf16.mxu0 0
        %1127 = vmatpush1.bf16.msra.mxu0 %v1111
        %1128 = vmatprep.subr.bf16.mxu0 0
        %1129 = vmatpush1.bf16.msra.mxu0 0
        %1130 = vmatprep.subr.bf16.mxu0 0
        %1131 = vmatpush1.bf16.msra.mxu0 0
        %1132 = vmatprep.subr.bf16.mxu0 0
        %1133 = vmatpush1.bf16.msra.mxu0 0
        %1134 = vmatprep.subr.bf16.mxu0 0
        %1135 = vmatpush1.bf16.msra.mxu0 0
        %1136 = vmatprep.subr.bf16.mxu0 0
        %1137 = vmatpush1.bf16.msra.mxu0 0
        %1138 = vmatprep.subr.bf16.mxu0 0
        %1139 = vmatpush1.bf16.msra.mxu0 0
        %1140 = vmatprep.subr.bf16.mxu0 0
        %1141 = vmatpush1.bf16.msra.mxu0 0
        %1142 = vmatprep.subr.bf16.mxu0 0
        %1143 = vmatpush1.bf16.msra.mxu0 0
        %1144 = vmatprep.mubr.bf16.mxu0 0
        %1145 = vmatmul.mubr.bf16.gmra.mrb[0].mxu0 %v1103
        %v1146 = vpop.f32.mrb[0].mxu0
        %v1147 = vadd.f32 0.0, %v1146
        %v1148 = vpop.f32.mrb[0].mxu0
        %v1149 = vpop.f32.mrb[0].mxu0
        %v1150 = vpop.f32.mrb[0].mxu0
        %1151 = vdwg.mxu0
        %v1152 = vadd.f32 %v1102, %v1147
        %1153 = vst.msk [vmem:[#allocation2] sm:$0xff] %vm869, %v1152
        %p1154 = scmp.eq.s32.totalorder %s34, 1
        // Predicated region
        $region57: #{tpu_custom_call.1} parent=51 // pred_check
          %p1155 = pneg %p1154
        $region58: #{tpu_custom_call.1} parent=51 // pred_check_branch
          %1157 = sbr.rel (%p1155) target = $region60
        $region59: #{tpu_custom_call.1} parent=51 // pred_region
          %v1158 = vld [vmem:[#allocation2] sm:$0xff]
          %v1159 = vpack.c.bf16 %v1158, %v1158
          %v1160 = vld [vmem:[%s7] sm:$0xf]
          %v1161 = vld [vmem:[%s7 + $0x4] sm:$0xf]
          %v1162 = vld [vmem:[%s8] sm:$0x1]
          %v1164 = vlaneseq
          %v1165 = vshrl.u32 %v1164, 7
          %v1166 = vsub.s32 0, %v1165
          %v1167 = vrot.slane %v1162, %v1166
          %v1171 = vunpack.c.l.b16 %v1160
          %v1172 = vunpack.c.l.b16 %v1161
          %v1173 = vpack.c.b16 %v1172, %v1171
          %v1176 = vsel %vm869, %v1159, 0
          %1178 = vmatprep.subr.bf16.mxu0 0
          %1179 = vmatpush1.bf16.msra.mxu0 %v1173
          %1180 = vmatprep.subr.bf16.mxu0 0
          %1181 = vmatpush1.bf16.msra.mxu0 0
          %1182 = vmatprep.subr.bf16.mxu0 0
          %1183 = vmatpush1.bf16.msra.mxu0 0
          %1184 = vmatprep.subr.bf16.mxu0 0
          %1185 = vmatpush1.bf16.msra.mxu0 0
          %1186 = vmatprep.subr.bf16.mxu0 0
          %1187 = vmatpush1.bf16.msra.mxu0 0
          %1188 = vmatprep.subr.bf16.mxu0 0
          %1189 = vmatpush1.bf16.msra.mxu0 0
          %1190 = vmatprep.subr.bf16.mxu0 0
          %1191 = vmatpush1.bf16.msra.mxu0 0
          %1192 = vmatprep.subr.bf16.mxu0 0
          %1193 = vmatpush1.bf16.msra.mxu0 0
          %1194 = vmatprep.subr.bf16.mxu0 0
          %1195 = vmatpush1.bf16.msra.mxu0 0
          %1196 = vmatprep.subr.bf16.mxu0 0
          %1197 = vmatpush1.bf16.msra.mxu0 0
          %1198 = vmatprep.subr.bf16.mxu0 0
          %1199 = vmatpush1.bf16.msra.mxu0 0
          %1200 = vmatprep.subr.bf16.mxu0 0
          %1201 = vmatpush1.bf16.msra.mxu0 0
          %1202 = vmatprep.subr.bf16.mxu0 0
          %1203 = vmatpush1.bf16.msra.mxu0 0
          %1204 = vmatprep.subr.bf16.mxu0 0
          %1205 = vmatpush1.bf16.msra.mxu0 0
          %1206 = vmatprep.subr.bf16.mxu0 0
          %1207 = vmatpush1.bf16.msra.mxu0 0
          %1208 = vmatprep.subr.bf16.mxu0 0
          %1209 = vmatpush1.bf16.msra.mxu0 0
          %1210 = vmatprep.mubr.bf16.mxu0 0
          %1211 = vmatmul.mubr.bf16.gmra.mrb[0].mxu0 %v1176
          %v1212 = vpop.f32.mrb[0].mxu0
          %v1213 = vadd.f32 %v1167, %v1212
          %v1214 = vpop.f32.mrb[0].mxu0
          %v1215 = vpop.f32.mrb[0].mxu0
          %v1216 = vpop.f32.mrb[0].mxu0
          %1217 = vdwg.mxu0
          %v1218 = vmul.f32 %v1213, %v1213
          %vm1219 = vcmask 261120
          %v1220 = vsel %vm1219, %v1218, 0.0
          %1221 = vadd.xlane.f32.xlu0 %v1220
          %v1222 = vpop.xlane.xlu0 %1221
          %v1223 = vadd.f32 %v1222, 1e-12
          %v1224 = vrsqrt.pop %v1223
          %v1225 = vmul.f32 %v1213, %v1224
          %1226 = vst.msk [vmem:[%s346] sm:$0xff] %vm1219, %v1225
        $region60: #{tpu_custom_call.1} parent=51 // pred_fallthru
          _
        %s1227 = sand.u32 %s229, 1
        %s1228 = scalar_lea.sflag [#allocation6], %s1227
        %s1229 = sand.u32 %s229, 1
        %s1230 = smul.addr %s1229, 8
        %s1231 = scalar_lea.vmem [#allocation5], %s1230
        // Predicated region
        $region61: #{tpu_custom_call.1} parent=51 // pred_check
          %p1232 = pneg %p239
        $region62: #{tpu_custom_call.1} parent=51 // pred_check_branch
          %1234 = sbr.rel (%p1232) target = $region64
        $region63: #{tpu_custom_call.1} parent=51 // pred_region
          %s1236 = ssub.s32 128, 128
          %1237 = vsyncadd %s1228, %s1236
          %s1238 = smul.addr %s33, 128
          %s1239 = scalar_lea.hbm %s9, %s1238
          %s1241 = sshll.u32 %s1231, 4
          %s1242 = int_to_ptr.vmem [resolvable:$true] %s1241
          %1244 = dma.vmem_to_hbm [thread:$0]  %s1242, 128, %s1239, %s1228
        $region64: #{tpu_custom_call.1} parent=51 // pred_fallthru
          _
      $region52: #{tpu_custom_call.1} parent=5 // pred_fallthru
        _
      %p1245 = scmp.le.s32.totalorder 2, %s24
      // Predicated region
      $region65: #{tpu_custom_call.1} parent=5 // pred_check
        %p1246 = pneg %p1245
      $region66: #{tpu_custom_call.1} parent=5 // pred_check_branch
        %1248 = sbr.rel (%p1246) target = $region68
      $region67: #{tpu_custom_call.1} parent=5 // pred_region
        %s1249 = ssub.s32 %s24, 2
        // Predicated region
        $region69: #{tpu_custom_call.1} parent=67 // pred_check
          %p1250 = pneg %p245
        $region70: #{tpu_custom_call.1} parent=67 // pred_check_branch
          %1252 = sbr.rel (%p1250) target = $region72
        $region71: #{tpu_custom_call.1} parent=67 // pred_region
          %s1253 = sand.u32 %s230, 1
          %s1254 = scalar_lea.sflag [#allocation6], %s1253
          %s1255 = sand.u32 %s230, 1
          %s1256 = smul.addr %s1255, 8
          %s1257 = scalar_lea.vmem [#allocation5], %s1256
          %1258 = dma.done %s1254, 128
        $region72: #{tpu_custom_call.1} parent=67 // pred_fallthru
          _
      $region68: #{tpu_custom_call.1} parent=5 // pred_fallthru
        _
    $region6: #{tpu_custom_call.1} parent=1 // loop_footer
      %s28 = sadd.s32 1, %s24
    $region7: #{tpu_custom_call.1} parent=1 // loop_footer_branch
      %23 = sbr.rel target = $region3
    $region8: #{tpu_custom_call.1} parent=1 // loop_exit
      _
    %1259 = vsyncpa [#allocation6], 1
    %s1260 = scalar_lea.sflag [#allocation6], 1
    %1261 = vsyncpa %s1260, 1

</llo_original>
